<compile_context>
chip_gen: v7x
topology: tpu7x:2x2x1
jax: 0.10.0
libtpu: 0.0.40
codegen_flags: <defaults>
</compile_context>

<pallas_src>
import math
from functools import partial

import jax
import jax.numpy as jnp
from jax.experimental import pallas as pl
from jax.experimental.pallas import tpu as pltpu


# ----------------------------- fused decoder kernel ---------------------------------

def _decoder_kernel(
    # inputs constant over the layer axis (x is per-batch-block)
    x_ref, pe_ref, mask_ref,
    few1_ref, feb1_ref, few2_ref, feb2_ref, few3_ref, feb3_ref,
    # per-layer stacked inputs (selected by layer grid index)
    wqkv_ref, bqkv_ref, wo_ref, bo_ref,
    ln1g_ref, ln1b_ref, wf1_ref, bf1_ref, wf2_ref, bf2_ref, ln2g_ref, ln2b_ref,
    # final head
    ng_ref, nb_ref, wout_ref, bout_ref,
    # output
    o_ref,
    # scratch (persists across grid steps; re-initialized at layer 0 of each batch block)
    h_ref,
    *, num_head, eps,
):
    li = pl.program_id(1)
    n_layers = pl.num_programs(1)

    Nb, d = h_ref.shape
    dh = d // num_head
    scale = 1.0 / math.sqrt(dh)

    def mm(a, w):
        # bf16 operands on the MXU, f32 accumulation.
        return jnp.dot(a.astype(jnp.bfloat16), w, preferred_element_type=jnp.float32)

    def layernorm(xx, g, b):
        mu = jnp.mean(xx, axis=-1, keepdims=True)
        xc = xx - mu
        var = jnp.mean(xc * xc, axis=-1, keepdims=True)
        return xc * jax.lax.rsqrt(var + eps) * g + b

    # ---- layer 0 of this batch block: FeatureExtracture + additive positional embedding ----
    @pl.when(li == 0)
    def _():
        t = mm(x_ref[...], few1_ref[...]) + feb1_ref[...]
        t = jnp.maximum(t, 0.0)
        t = mm(t, few2_ref[...]) + feb2_ref[...]
        t = jnp.maximum(t, 0.0)
        t = mm(t, few3_ref[...]) + feb3_ref[...]
        h_ref[...] = t + pe_ref[...]

    h = h_ref[...]                      # [Nb, d] VMEM-resident activation
    mask_add = mask_ref[...]            # [Nb, Nb] additive mask (0 keep / -1e9 drop)

    # ---- self-attention sublayer (pre-LN, residual) ----
    xn = layernorm(h, ln1g_ref[0], ln1b_ref[0])
    qkv = mm(xn, wqkv_ref[0]) + bqkv_ref[0]            # fused QKV projection: [Nb, 3d]
    q, k, v = qkv[:, :d], qkv[:, d:2 * d], qkv[:, 2 * d:]

    kt_dims = (((1,), (1,)), ((), ()))                 # contract feature dim -> q @ k^T
    heads = []
    for hh in range(num_head):                         # static unroll, num_head is small
        sl = slice(hh * dh, (hh + 1) * dh)
        q_h = q[:, sl].astype(jnp.bfloat16)            # [Nb, dh]
        k_h = k[:, sl].astype(jnp.bfloat16)
        v_h = v[:, sl].astype(jnp.bfloat16)
        s = jax.lax.dot_general(q_h, k_h, kt_dims,
                                preferred_element_type=jnp.float32)   # [Nb, Nb]
        s = s * scale + mask_add
        s = s - jnp.max(s, axis=-1, keepdims=True)
        p = jnp.exp(s)
        p = p * pl.reciprocal(jnp.sum(p, axis=-1, keepdims=True), approx=True)
        heads.append(jnp.dot(p.astype(jnp.bfloat16), v_h,
                             preferred_element_type=jnp.float32))     # [Nb, dh]
    attn = jnp.concatenate(heads, axis=-1)             # [Nb, d] == concat over heads
    attn = mm(attn, wo_ref[0]) + bo_ref[0]
    h = h + attn

    # ---- feed-forward sublayer (pre-LN, residual) ----
    xn = layernorm(h, ln2g_ref[0], ln2b_ref[0])
    f = mm(xn, wf1_ref[0]) + bf1_ref[0]
    f = jnp.maximum(f, 0.0)
    f = mm(f, wf2_ref[0]) + bf2_ref[0]
    h = h + f
    h_ref[...] = h

    # ---- last layer: final LayerNorm + output linear + softmax ----
    @pl.when(li == n_layers - 1)
    def _():
        hn = layernorm(h, ng_ref[...], nb_ref[...])
        y = mm(hn, wout_ref[...]) + bout_ref[...]
        y = y - jnp.max(y, axis=-1, keepdims=True)
        e = jnp.exp(y)
        o_ref[...] = e / jnp.sum(e, axis=-1, keepdims=True)   # exact normalize for output


# ----------------------------- parameter setup (deterministic) ----------------------

def _lin_init(key, din, dout, scale=0.1):
    kw, kb = jax.random.split(key)
    w = jax.random.normal(kw, (din, dout), jnp.float32) * scale
    b = jax.random.normal(kb, (dout,), jnp.float32) * scale
    return w, b


def init_decoder_params(key, input_size, m, attention_size, num_layers, num_head):
    d = attention_size
    d_ff = 4 * d
    keys = jax.random.split(key, 4 + num_layers)

    k_fe = jax.random.split(keys[0], 3)
    fe = {}
    fe["w1"], fe["b1"] = _lin_init(k_fe[0], input_size, d * 3)
    fe["w2"], fe["b2"] = _lin_init(k_fe[1], d * 3, d * 3)
    fe["w3"], fe["b3"] = _lin_init(k_fe[2], d * 3, d)

    layers = []
    for li in range(num_layers):
        lk = jax.random.split(keys[1 + li], 6)
        lyr = {}
        lyr["wq"], lyr["bq"] = _lin_init(lk[0], d, d)
        lyr["wk"], lyr["bk"] = _lin_init(lk[1], d, d)
        lyr["wv"], lyr["bv"] = _lin_init(lk[2], d, d)
        lyr["wo"], lyr["bo"] = _lin_init(lk[3], d, d)
        lyr["wf1"], lyr["bf1"] = _lin_init(lk[4], d, d_ff)
        lyr["wf2"], lyr["bf2"] = _lin_init(lk[5], d_ff, d)
        lyr["ln1_g"] = jnp.ones((d,), jnp.float32)
        lyr["ln1_b"] = jnp.zeros((d,), jnp.float32)
        lyr["ln2_g"] = jnp.ones((d,), jnp.float32)
        lyr["ln2_b"] = jnp.zeros((d,), jnp.float32)
        layers.append(lyr)

    params = {
        "fe": fe,
        "layers": layers,
        "norm_g": jnp.ones((d,), jnp.float32),
        "norm_b": jnp.zeros((d,), jnp.float32),
    }
    params["wout"], params["bout"] = _lin_init(keys[1 + num_layers], d, 2 ** m)
    return params


def sinusoidal_pe(max_len, d):
    pos = jnp.arange(max_len, dtype=jnp.float32)[:, None]
    idx = jnp.arange(0, d, 2, dtype=jnp.float32)
    div = jnp.exp(-idx * (math.log(10000.0) / d))
    pe = jnp.zeros((max_len, d), jnp.float32)
    pe = pe.at[:, 0::2].set(jnp.sin(pos * div))
    pe = pe.at[:, 1::2].set(jnp.cos(pos * div))
    return pe


# ----------------------------- Decoder forward ---------------------------------------

def decoder_forward(params, x, mask, pe, *, m, num_head, samples_per_block=1):
    x = x.astype(jnp.float32)
    B, L, in_sz = x.shape
    d = params["norm_g"].shape[0]
    layers = params["layers"]
    NL = len(layers)
    nout = 2 ** m

    BB = samples_per_block
    assert B % BB == 0, "samples_per_block must divide batch"
    n_bblk = B // BB
    Nb = BB * L                       # rows per batch block
    N = B * L

    wdt = jnp.bfloat16                # MXU operand dtype for weight matrices

    # --- cheap one-time wrapper glue (plain XLA) ---
    x2d = x.reshape(N, in_sz)
    pe_blk = jnp.tile(pe[:L].astype(jnp.float32), (BB, 1))                       # [Nb, d]
    # per-batch-block block-diagonal additive mask (0 keep / -1e9 drop); tiny [Nb, Nb]
    keep = jnp.kron(jnp.eye(BB, dtype=jnp.float32), mask.astype(jnp.float32))
    mask_add = jnp.where(keep > 0, 0.0, -1e9).astype(jnp.float32)

    fe = params["fe"]
    row = lambda b: b.reshape(1, -1).astype(jnp.float32)

    def stack(fn):
        return jnp.stack([fn(lyr) for lyr in layers], axis=0)

    # fused QKV weights / biases
    wqkv = stack(lambda l: jnp.concatenate([l["wq"], l["wk"], l["wv"]], axis=1)).astype(wdt)
    bqkv = stack(lambda l: jnp.concatenate([l["bq"], l["bk"], l["bv"]], axis=0).reshape(1, -1))
    wo   = stack(lambda l: l["wo"]).astype(wdt)
    bo   = stack(lambda l: l["bo"].reshape(1, -1))
    ln1g = stack(lambda l: l["ln1_g"].reshape(1, -1))
    ln1b = stack(lambda l: l["ln1_b"].reshape(1, -1))
    wf1  = stack(lambda l: l["wf1"]).astype(wdt)
    bf1  = stack(lambda l: l["bf1"].reshape(1, -1))
    wf2  = stack(lambda l: l["wf2"]).astype(wdt)
    bf2  = stack(lambda l: l["bf2"].reshape(1, -1))
    ln2g = stack(lambda l: l["ln2_g"].reshape(1, -1))
    ln2b = stack(lambda l: l["ln2_b"].reshape(1, -1))

    const_inputs = [
        x2d, pe_blk, mask_add,
        fe["w1"].astype(wdt), row(fe["b1"]),
        fe["w2"].astype(wdt), row(fe["b2"]),
        fe["w3"].astype(wdt), row(fe["b3"]),
    ]
    layer_inputs = [wqkv, bqkv, wo, bo, ln1g, ln1b, wf1, bf1, wf2, bf2, ln2g, ln2b]
    tail_inputs = [
        row(params["norm_g"]), row(params["norm_b"]),
        params["wout"].astype(wdt), row(params["bout"]),
    ]
    all_inputs = const_inputs + layer_inputs + tail_inputs

    def const_spec(a):          # constant over the grid, VMEM-resident
        r, c = a.shape
        return pl.BlockSpec((r, c), lambda b, l: (0, 0))

    def layer_spec(a):          # per-layer stacked: select layer l
        _, r, c = a.shape
        return pl.BlockSpec((1, r, c), lambda b, l: (l, 0, 0))

    x_spec = pl.BlockSpec((Nb, in_sz), lambda b, l: (b, 0))   # per batch block

    in_specs = ([x_spec] + [const_spec(a) for a in const_inputs[1:]]
                + [layer_spec(a) for a in layer_inputs]
                + [const_spec(a) for a in tail_inputs])

    out = pl.pallas_call(
        partial(_decoder_kernel, num_head=num_head, eps=1e-5),
        out_shape=jax.ShapeDtypeStruct((N, nout), jnp.float32),
        grid=(n_bblk, NL),
        in_specs=in_specs,
        out_specs=pl.BlockSpec((Nb, nout), lambda b, l: (b, 0)),
        scratch_shapes=[pltpu.VMEM((Nb, d), jnp.float32)],
        compiler_params=pltpu.CompilerParams(
            dimension_semantics=("parallel", "arbitrary")),
    )(*all_inputs)

    return out.reshape(B, L, nout)


# ----------------------------- main ---------------------------------------------------

if __name__ == "__main__":
    input_size = 6
    m = 3
    attention_size = 32
    num_layers = 2
    num_head = 4
    B, L = 2, 8

    key = jax.random.PRNGKey(0)
    k_param, k_x = jax.random.split(key)

    params = init_decoder_params(k_param, input_size, m, attention_size, num_layers, num_head)
    pe = sinusoidal_pe(64, attention_size)

    x = jax.random.normal(k_x, (B, L, input_size), jnp.float32)
    mask = jnp.tril(jnp.ones((L, L), jnp.float32))  # subsequent (causal) mask

    out = decoder_forward(params, x, mask, pe, m=m, num_head=num_head, samples_per_block=1)
    out = jax.block_until_ready(out)

    assert out.shape == (B, L, 2 ** m)
    assert bool(jnp.all(jnp.isfinite(out)))
    assert bool(jnp.allclose(out.sum(-1), 1.0, atol=1e-4))
    print("KERNEL_OK")
</pallas_src>

<mosaic_0001>
module attributes {stable_mosaic.version = 11 : i64} {
  func.func @_decoder_kernel(%arg0: i32, %arg1: i32, %arg2: memref<8x6xf32, #tpu.memory_space<vmem>>, %arg3: memref<8x32xf32, #tpu.memory_space<vmem>>, %arg4: memref<8x8xf32, #tpu.memory_space<vmem>>, %arg5: memref<6x96xbf16, #tpu.memory_space<vmem>>, %arg6: memref<1x96xf32, #tpu.memory_space<vmem>>, %arg7: memref<96x96xbf16, #tpu.memory_space<vmem>>, %arg8: memref<1x96xf32, #tpu.memory_space<vmem>>, %arg9: memref<96x32xbf16, #tpu.memory_space<vmem>>, %arg10: memref<1x32xf32, #tpu.memory_space<vmem>>, %arg11: memref<1x32x96xbf16, #tpu.memory_space<vmem>>, %arg12: memref<1x1x96xf32, #tpu.memory_space<vmem>>, %arg13: memref<1x32x32xbf16, #tpu.memory_space<vmem>>, %arg14: memref<1x1x32xf32, #tpu.memory_space<vmem>>, %arg15: memref<1x1x32xf32, #tpu.memory_space<vmem>>, %arg16: memref<1x1x32xf32, #tpu.memory_space<vmem>>, %arg17: memref<1x32x128xbf16, #tpu.memory_space<vmem>>, %arg18: memref<1x1x128xf32, #tpu.memory_space<vmem>>, %arg19: memref<1x128x32xbf16, #tpu.memory_space<vmem>>, %arg20: memref<1x1x32xf32, #tpu.memory_space<vmem>>, %arg21: memref<1x1x32xf32, #tpu.memory_space<vmem>>, %arg22: memref<1x1x32xf32, #tpu.memory_space<vmem>>, %arg23: memref<1x32xf32, #tpu.memory_space<vmem>>, %arg24: memref<1x32xf32, #tpu.memory_space<vmem>>, %arg25: memref<32x8xbf16, #tpu.memory_space<vmem>>, %arg26: memref<1x8xf32, #tpu.memory_space<vmem>>, %arg27: memref<8x8xf32, #tpu.memory_space<vmem>>, %arg28: memref<8x32xf32, #tpu.memory_space<vmem>>) attributes {dimension_semantics = [#tpu.dimension_semantics<parallel>, #tpu.dimension_semantics<arbitrary>], iteration_bounds = array<i64: 2, 2>, scalar_prefetch = 0 : i64, scratch_operands = 1 : i64, tpu.core_type = #tpu.core_type<tc>, window_params = [{transform_indices = @transform_0, window_bounds = array<i64: 8, 6>}, {pipeline_mode = #tpu.pipeline_mode<synchronous>, transform_indices = @transform_1, window_bounds = array<i64: 8, 32>}, {pipeline_mode = #tpu.pipeline_mode<synchronous>, transform_indices = @transform_2, window_bounds = array<i64: 8, 8>}, {pipeline_mode = #tpu.pipeline_mode<synchronous>, transform_indices = @transform_3, window_bounds = array<i64: 6, 96>}, {pipeline_mode = #tpu.pipeline_mode<synchronous>, transform_indices = @transform_4, window_bounds = array<i64: 1, 96>}, {pipeline_mode = #tpu.pipeline_mode<synchronous>, transform_indices = @transform_5, window_bounds = array<i64: 96, 96>}, {pipeline_mode = #tpu.pipeline_mode<synchronous>, transform_indices = @transform_6, window_bounds = array<i64: 1, 96>}, {pipeline_mode = #tpu.pipeline_mode<synchronous>, transform_indices = @transform_7, window_bounds = array<i64: 96, 32>}, {pipeline_mode = #tpu.pipeline_mode<synchronous>, transform_indices = @transform_8, window_bounds = array<i64: 1, 32>}, {transform_indices = @transform_9, window_bounds = array<i64: 1, 32, 96>}, {transform_indices = @transform_10, window_bounds = array<i64: 1, 1, 96>}, {transform_indices = @transform_11, window_bounds = array<i64: 1, 32, 32>}, {transform_indices = @transform_12, window_bounds = array<i64: 1, 1, 32>}, {transform_indices = @transform_13, window_bounds = array<i64: 1, 1, 32>}, {transform_indices = @transform_14, window_bounds = array<i64: 1, 1, 32>}, {transform_indices = @transform_15, window_bounds = array<i64: 1, 32, 128>}, {transform_indices = @transform_16, window_bounds = array<i64: 1, 1, 128>}, {transform_indices = @transform_17, window_bounds = array<i64: 1, 128, 32>}, {transform_indices = @transform_18, window_bounds = array<i64: 1, 1, 32>}, {transform_indices = @transform_19, window_bounds = array<i64: 1, 1, 32>}, {transform_indices = @transform_20, window_bounds = array<i64: 1, 1, 32>}, {pipeline_mode = #tpu.pipeline_mode<synchronous>, transform_indices = @transform_21, window_bounds = array<i64: 1, 32>}, {pipeline_mode = #tpu.pipeline_mode<synchronous>, transform_indices = @transform_22, window_bounds = array<i64: 1, 32>}, {pipeline_mode = #tpu.pipeline_mode<synchronous>, transform_indices = @transform_23, window_bounds = array<i64: 32, 8>}, {pipeline_mode = #tpu.pipeline_mode<synchronous>, transform_indices = @transform_24, window_bounds = array<i64: 1, 8>}, {transform_indices = @transform_25, window_bounds = array<i64: 8, 8>}]} {
    %c0_i32 = arith.constant 0 : i32
    %0 = arith.cmpi eq, %arg1, %c0_i32 : i32
    %1 = arith.extui %0 : i1 to i32
    %c0_i32_0 = arith.constant 0 : i32
    %2 = arith.cmpi ne, %1, %c0_i32_0 : i32
    scf.if %2 {
      %c0_77 = arith.constant 0 : index
      %c0_78 = arith.constant 0 : index
      %185 = vector.load %arg2[%c0_77, %c0_78] : memref<8x6xf32, #tpu.memory_space<vmem>>, vector<8x6xf32>
      %c0_79 = arith.constant 0 : index
      %c0_80 = arith.constant 0 : index
      %186 = vector.load %arg5[%c0_79, %c0_80] : memref<6x96xbf16, #tpu.memory_space<vmem>>, vector<6x96xbf16>
      %187 = arith.truncf %185 : vector<8x6xf32> to vector<8x6xbf16>
      %cst_81 = arith.constant dense<0.000000e+00> : vector<8x96xf32>
      %188 = tpu.matmul %187, %186, %cst_81 {dimension_numbers = #tpu.dot_dimension_numbers<[1], [0], [0], [1], [0, 0, 1, 1], [], []>} : vector<8x6xbf16>, vector<6x96xbf16>, vector<8x96xf32> -> vector<8x96xf32>
      %c0_82 = arith.constant 0 : index
      %c0_83 = arith.constant 0 : index
      %189 = vector.load %arg6[%c0_82, %c0_83] : memref<1x96xf32, #tpu.memory_space<vmem>>, vector<1x96xf32>
      %190 = vector.broadcast %189 : vector<1x96xf32> to vector<8x96xf32>
      %191 = arith.addf %188, %190 : vector<8x96xf32>
      %cst_84 = arith.constant 0.000000e+00 : f32
      %192 = vector.broadcast %cst_84 : f32 to vector<8x96xf32>
      %193 = arith.maximumf %191, %192 : vector<8x96xf32>
      %c0_85 = arith.constant 0 : index
      %c0_86 = arith.constant 0 : index
      %194 = vector.load %arg7[%c0_85, %c0_86] : memref<96x96xbf16, #tpu.memory_space<vmem>>, vector<96x96xbf16>
      %195 = arith.truncf %193 : vector<8x96xf32> to vector<8x96xbf16>
      %cst_87 = arith.constant dense<0.000000e+00> : vector<8x96xf32>
      %196 = tpu.matmul %195, %194, %cst_87 {dimension_numbers = #tpu.dot_dimension_numbers<[1], [0], [0], [1], [0, 0, 1, 1], [], []>} : vector<8x96xbf16>, vector<96x96xbf16>, vector<8x96xf32> -> vector<8x96xf32>
      %c0_88 = arith.constant 0 : index
      %c0_89 = arith.constant 0 : index
      %197 = vector.load %arg8[%c0_88, %c0_89] : memref<1x96xf32, #tpu.memory_space<vmem>>, vector<1x96xf32>
      %198 = vector.broadcast %197 : vector<1x96xf32> to vector<8x96xf32>
      %199 = arith.addf %196, %198 : vector<8x96xf32>
      %cst_90 = arith.constant 0.000000e+00 : f32
      %200 = vector.broadcast %cst_90 : f32 to vector<8x96xf32>
      %201 = arith.maximumf %199, %200 : vector<8x96xf32>
      %c0_91 = arith.constant 0 : index
      %c0_92 = arith.constant 0 : index
      %202 = vector.load %arg9[%c0_91, %c0_92] : memref<96x32xbf16, #tpu.memory_space<vmem>>, vector<96x32xbf16>
      %203 = arith.truncf %201 : vector<8x96xf32> to vector<8x96xbf16>
      %cst_93 = arith.constant dense<0.000000e+00> : vector<8x32xf32>
      %204 = tpu.matmul %203, %202, %cst_93 {dimension_numbers = #tpu.dot_dimension_numbers<[1], [0], [0], [1], [0, 0, 1, 1], [], []>} : vector<8x96xbf16>, vector<96x32xbf16>, vector<8x32xf32> -> vector<8x32xf32>
      %c0_94 = arith.constant 0 : index
      %c0_95 = arith.constant 0 : index
      %205 = vector.load %arg10[%c0_94, %c0_95] : memref<1x32xf32, #tpu.memory_space<vmem>>, vector<1x32xf32>
      %206 = vector.broadcast %205 : vector<1x32xf32> to vector<8x32xf32>
      %207 = arith.addf %204, %206 : vector<8x32xf32>
      %c0_96 = arith.constant 0 : index
      %c0_97 = arith.constant 0 : index
      %208 = vector.load %arg3[%c0_96, %c0_97] : memref<8x32xf32, #tpu.memory_space<vmem>>, vector<8x32xf32>
      %209 = arith.addf %207, %208 : vector<8x32xf32>
      %c0_98 = arith.constant 0 : index
      %c0_99 = arith.constant 0 : index
      %210 = vector.load %arg28[%c0_98, %c0_99] : memref<8x32xf32, #tpu.memory_space<vmem>>, vector<8x32xf32>
      tpu.vector_store %arg28[%c0_98, %c0_99], %209 {strides = array<i32>} : memref<8x32xf32, #tpu.memory_space<vmem>>, vector<8x32xf32>,
    } else {
    }
    %c0 = arith.constant 0 : index
    %c0_1 = arith.constant 0 : index
    %3 = vector.load %arg28[%c0, %c0_1] : memref<8x32xf32, #tpu.memory_space<vmem>>, vector<8x32xf32>
    %c0_2 = arith.constant 0 : index
    %c0_3 = arith.constant 0 : index
    %4 = vector.load %arg4[%c0_2, %c0_3] : memref<8x8xf32, #tpu.memory_space<vmem>>, vector<8x8xf32>
    %c0_4 = arith.constant 0 : index
    %c0_5 = arith.constant 0 : index
    %c0_6 = arith.constant 0 : index
    %5 = vector.load %arg15[%c0_4, %c0_5, %c0_6] : memref<1x1x32xf32, #tpu.memory_space<vmem>>, vector<1x1x32xf32>
    %6 = vector.shape_cast %5 : vector<1x1x32xf32> to vector<1x32xf32>
    %c0_7 = arith.constant 0 : index
    %c0_8 = arith.constant 0 : index
    %c0_9 = arith.constant 0 : index
    %7 = vector.load %arg16[%c0_7, %c0_8, %c0_9] : memref<1x1x32xf32, #tpu.memory_space<vmem>>, vector<1x1x32xf32>
    %8 = vector.shape_cast %7 : vector<1x1x32xf32> to vector<1x32xf32>
    %cst = arith.constant dense<0.000000e+00> : vector<8xf32>
    %9 = vector.multi_reduction <add>, %3, %cst [1] : vector<8x32xf32> to vector<8xf32>
    %10 = vector.shape_cast %9 : vector<8xf32> to vector<8x1xf32>
    %cst_10 = arith.constant 3.200000e+01 : f32
    %11 = vector.broadcast %cst_10 : f32 to vector<8x1xf32>
    %12 = arith.divf %10, %11 : vector<8x1xf32>
    %13 = vector.broadcast %12 : vector<8x1xf32> to vector<8x32xf32>
    %14 = arith.subf %3, %13 : vector<8x32xf32>
    %15 = arith.mulf %14, %14 : vector<8x32xf32>
    %cst_11 = arith.constant dense<0.000000e+00> : vector<8xf32>
    %16 = vector.multi_reduction <add>, %15, %cst_11 [1] : vector<8x32xf32> to vector<8xf32>
    %17 = vector.shape_cast %16 : vector<8xf32> to vector<8x1xf32>
    %cst_12 = arith.constant 3.200000e+01 : f32
    %18 = vector.broadcast %cst_12 : f32 to vector<8x1xf32>
    %19 = arith.divf %17, %18 : vector<8x1xf32>
    %cst_13 = arith.constant 9.99999974E-6 : f32
    %20 = vector.broadcast %cst_13 : f32 to vector<8x1xf32>
    %21 = arith.addf %19, %20 : vector<8x1xf32>
    %22 = math.rsqrt %21 : vector<8x1xf32>
    %23 = vector.broadcast %22 : vector<8x1xf32> to vector<8x32xf32>
    %24 = arith.mulf %14, %23 : vector<8x32xf32>
    %25 = vector.broadcast %6 : vector<1x32xf32> to vector<8x32xf32>
    %26 = arith.mulf %24, %25 : vector<8x32xf32>
    %27 = vector.broadcast %8 : vector<1x32xf32> to vector<8x32xf32>
    %28 = arith.addf %26, %27 : vector<8x32xf32>
    %c0_14 = arith.constant 0 : index
    %c0_15 = arith.constant 0 : index
    %c0_16 = arith.constant 0 : index
    %29 = vector.load %arg11[%c0_14, %c0_15, %c0_16] : memref<1x32x96xbf16, #tpu.memory_space<vmem>>, vector<1x32x96xbf16>
    %30 = vector.shape_cast %29 : vector<1x32x96xbf16> to vector<32x96xbf16>
    %31 = arith.truncf %28 : vector<8x32xf32> to vector<8x32xbf16>
    %cst_17 = arith.constant dense<0.000000e+00> : vector<8x96xf32>
    %32 = tpu.matmul %31, %30, %cst_17 {dimension_numbers = #tpu.dot_dimension_numbers<[1], [0], [0], [1], [0, 0, 1, 1], [], []>} : vector<8x32xbf16>, vector<32x96xbf16>, vector<8x96xf32> -> vector<8x96xf32>
    %c0_18 = arith.constant 0 : index
    %c0_19 = arith.constant 0 : index
    %c0_20 = arith.constant 0 : index
    %33 = vector.load %arg12[%c0_18, %c0_19, %c0_20] : memref<1x1x96xf32, #tpu.memory_space<vmem>>, vector<1x1x96xf32>
    %34 = vector.shape_cast %33 : vector<1x1x96xf32> to vector<1x96xf32>
    %35 = vector.broadcast %34 : vector<1x96xf32> to vector<8x96xf32>
    %36 = arith.addf %32, %35 : vector<8x96xf32>
    %37 = vector.extract_strided_slice %36 {offsets = [0, 0], sizes = [8, 32], strides = [1, 1]} : vector<8x96xf32> to vector<8x32xf32>
    %38 = vector.extract_strided_slice %36 {offsets = [0, 32], sizes = [8, 32], strides = [1, 1]} : vector<8x96xf32> to vector<8x32xf32>
    %39 = vector.extract_strided_slice %36 {offsets = [0, 64], sizes = [8, 32], strides = [1, 1]} : vector<8x96xf32> to vector<8x32xf32>
    %40 = vector.extract_strided_slice %37 {offsets = [0, 0], sizes = [8, 8], strides = [1, 1]} : vector<8x32xf32> to vector<8x8xf32>
    %41 = arith.truncf %40 : vector<8x8xf32> to vector<8x8xbf16>
    %42 = vector.extract_strided_slice %38 {offsets = [0, 0], sizes = [8, 8], strides = [1, 1]} : vector<8x32xf32> to vector<8x8xf32>
    %43 = arith.truncf %42 : vector<8x8xf32> to vector<8x8xbf16>
    %44 = vector.extract_strided_slice %39 {offsets = [0, 0], sizes = [8, 8], strides = [1, 1]} : vector<8x32xf32> to vector<8x8xf32>
    %45 = arith.truncf %44 : vector<8x8xf32> to vector<8x8xbf16>
    %cst_21 = arith.constant dense<0.000000e+00> : vector<8x8xf32>
    %46 = tpu.matmul %41, %43, %cst_21 {dimension_numbers = #tpu.dot_dimension_numbers<[1], [1], [0], [0], [0, 0, 1, 0], [], []>} : vector<8x8xbf16>, vector<8x8xbf16>, vector<8x8xf32> -> vector<8x8xf32>
    %cst_22 = arith.constant 0.353553385 : f32
    %47 = vector.broadcast %cst_22 : f32 to vector<8x8xf32>
    %48 = arith.mulf %46, %47 : vector<8x8xf32>
    %49 = arith.addf %48, %4 : vector<8x8xf32>
    %cst_23 = arith.constant dense<0xFF800000> : vector<8xf32>
    %50 = vector.multi_reduction <maximumf>, %49, %cst_23 [1] : vector<8x8xf32> to vector<8xf32>
    %51 = vector.shape_cast %50 : vector<8xf32> to vector<8x1xf32>
    %52 = vector.broadcast %51 : vector<8x1xf32> to vector<8x8xf32>
    %53 = arith.subf %49, %52 : vector<8x8xf32>
    %54 = math.exp %53 : vector<8x8xf32>
    %cst_24 = arith.constant dense<0.000000e+00> : vector<8xf32>
    %55 = vector.multi_reduction <add>, %54, %cst_24 [1] : vector<8x8xf32> to vector<8xf32>
    %56 = vector.shape_cast %55 : vector<8xf32> to vector<8x1xf32>
    %57 = tpu.reciprocal %56 {approx = true} : vector<8x1xf32> -> vector<8x1xf32>
    %58 = vector.broadcast %57 : vector<8x1xf32> to vector<8x8xf32>
    %59 = arith.mulf %54, %58 : vector<8x8xf32>
    %60 = arith.truncf %59 : vector<8x8xf32> to vector<8x8xbf16>
    %cst_25 = arith.constant dense<0.000000e+00> : vector<8x8xf32>
    %61 = tpu.matmul %60, %45, %cst_25 {dimension_numbers = #tpu.dot_dimension_numbers<[1], [0], [0], [1], [0, 0, 1, 1], [], []>} : vector<8x8xbf16>, vector<8x8xbf16>, vector<8x8xf32> -> vector<8x8xf32>
    %62 = vector.extract_strided_slice %37 {offsets = [0, 8], sizes = [8, 8], strides = [1, 1]} : vector<8x32xf32> to vector<8x8xf32>
    %63 = arith.truncf %62 : vector<8x8xf32> to vector<8x8xbf16>
    %64 = vector.extract_strided_slice %38 {offsets = [0, 8], sizes = [8, 8], strides = [1, 1]} : vector<8x32xf32> to vector<8x8xf32>
    %65 = arith.truncf %64 : vector<8x8xf32> to vector<8x8xbf16>
    %66 = vector.extract_strided_slice %39 {offsets = [0, 8], sizes = [8, 8], strides = [1, 1]} : vector<8x32xf32> to vector<8x8xf32>
    %67 = arith.truncf %66 : vector<8x8xf32> to vector<8x8xbf16>
    %cst_26 = arith.constant dense<0.000000e+00> : vector<8x8xf32>
    %68 = tpu.matmul %63, %65, %cst_26 {dimension_numbers = #tpu.dot_dimension_numbers<[1], [1], [0], [0], [0, 0, 1, 0], [], []>} : vector<8x8xbf16>, vector<8x8xbf16>, vector<8x8xf32> -> vector<8x8xf32>
    %cst_27 = arith.constant 0.353553385 : f32
    %69 = vector.broadcast %cst_27 : f32 to vector<8x8xf32>
    %70 = arith.mulf %68, %69 : vector<8x8xf32>
    %71 = arith.addf %70, %4 : vector<8x8xf32>
    %cst_28 = arith.constant dense<0xFF800000> : vector<8xf32>
    %72 = vector.multi_reduction <maximumf>, %71, %cst_28 [1] : vector<8x8xf32> to vector<8xf32>
    %73 = vector.shape_cast %72 : vector<8xf32> to vector<8x1xf32>
    %74 = vector.broadcast %73 : vector<8x1xf32> to vector<8x8xf32>
    %75 = arith.subf %71, %74 : vector<8x8xf32>
    %76 = math.exp %75 : vector<8x8xf32>
    %cst_29 = arith.constant dense<0.000000e+00> : vector<8xf32>
    %77 = vector.multi_reduction <add>, %76, %cst_29 [1] : vector<8x8xf32> to vector<8xf32>
    %78 = vector.shape_cast %77 : vector<8xf32> to vector<8x1xf32>
    %79 = tpu.reciprocal %78 {approx = true} : vector<8x1xf32> -> vector<8x1xf32>
    %80 = vector.broadcast %79 : vector<8x1xf32> to vector<8x8xf32>
    %81 = arith.mulf %76, %80 : vector<8x8xf32>
    %82 = arith.truncf %81 : vector<8x8xf32> to vector<8x8xbf16>
    %cst_30 = arith.constant dense<0.000000e+00> : vector<8x8xf32>
    %83 = tpu.matmul %82, %67, %cst_30 {dimension_numbers = #tpu.dot_dimension_numbers<[1], [0], [0], [1], [0, 0, 1, 1], [], []>} : vector<8x8xbf16>, vector<8x8xbf16>, vector<8x8xf32> -> vector<8x8xf32>
    %84 = vector.extract_strided_slice %37 {offsets = [0, 16], sizes = [8, 8], strides = [1, 1]} : vector<8x32xf32> to vector<8x8xf32>
    %85 = arith.truncf %84 : vector<8x8xf32> to vector<8x8xbf16>
    %86 = vector.extract_strided_slice %38 {offsets = [0, 16], sizes = [8, 8], strides = [1, 1]} : vector<8x32xf32> to vector<8x8xf32>
    %87 = arith.truncf %86 : vector<8x8xf32> to vector<8x8xbf16>
    %88 = vector.extract_strided_slice %39 {offsets = [0, 16], sizes = [8, 8], strides = [1, 1]} : vector<8x32xf32> to vector<8x8xf32>
    %89 = arith.truncf %88 : vector<8x8xf32> to vector<8x8xbf16>
    %cst_31 = arith.constant dense<0.000000e+00> : vector<8x8xf32>
    %90 = tpu.matmul %85, %87, %cst_31 {dimension_numbers = #tpu.dot_dimension_numbers<[1], [1], [0], [0], [0, 0, 1, 0], [], []>} : vector<8x8xbf16>, vector<8x8xbf16>, vector<8x8xf32> -> vector<8x8xf32>
    %cst_32 = arith.constant 0.353553385 : f32
    %91 = vector.broadcast %cst_32 : f32 to vector<8x8xf32>
    %92 = arith.mulf %90, %91 : vector<8x8xf32>
    %93 = arith.addf %92, %4 : vector<8x8xf32>
    %cst_33 = arith.constant dense<0xFF800000> : vector<8xf32>
    %94 = vector.multi_reduction <maximumf>, %93, %cst_33 [1] : vector<8x8xf32> to vector<8xf32>
    %95 = vector.shape_cast %94 : vector<8xf32> to vector<8x1xf32>
    %96 = vector.broadcast %95 : vector<8x1xf32> to vector<8x8xf32>
    %97 = arith.subf %93, %96 : vector<8x8xf32>
    %98 = math.exp %97 : vector<8x8xf32>
    %cst_34 = arith.constant dense<0.000000e+00> : vector<8xf32>
    %99 = vector.multi_reduction <add>, %98, %cst_34 [1] : vector<8x8xf32> to vector<8xf32>
    %100 = vector.shape_cast %99 : vector<8xf32> to vector<8x1xf32>
    %101 = tpu.reciprocal %100 {approx = true} : vector<8x1xf32> -> vector<8x1xf32>
    %102 = vector.broadcast %101 : vector<8x1xf32> to vector<8x8xf32>
    %103 = arith.mulf %98, %102 : vector<8x8xf32>
    %104 = arith.truncf %103 : vector<8x8xf32> to vector<8x8xbf16>
    %cst_35 = arith.constant dense<0.000000e+00> : vector<8x8xf32>
    %105 = tpu.matmul %104, %89, %cst_35 {dimension_numbers = #tpu.dot_dimension_numbers<[1], [0], [0], [1], [0, 0, 1, 1], [], []>} : vector<8x8xbf16>, vector<8x8xbf16>, vector<8x8xf32> -> vector<8x8xf32>
    %106 = vector.extract_strided_slice %37 {offsets = [0, 24], sizes = [8, 8], strides = [1, 1]} : vector<8x32xf32> to vector<8x8xf32>
    %107 = arith.truncf %106 : vector<8x8xf32> to vector<8x8xbf16>
    %108 = vector.extract_strided_slice %38 {offsets = [0, 24], sizes = [8, 8], strides = [1, 1]} : vector<8x32xf32> to vector<8x8xf32>
    %109 = arith.truncf %108 : vector<8x8xf32> to vector<8x8xbf16>
    %110 = vector.extract_strided_slice %39 {offsets = [0, 24], sizes = [8, 8], strides = [1, 1]} : vector<8x32xf32> to vector<8x8xf32>
    %111 = arith.truncf %110 : vector<8x8xf32> to vector<8x8xbf16>
    %cst_36 = arith.constant dense<0.000000e+00> : vector<8x8xf32>
    %112 = tpu.matmul %107, %109, %cst_36 {dimension_numbers = #tpu.dot_dimension_numbers<[1], [1], [0], [0], [0, 0, 1, 0], [], []>} : vector<8x8xbf16>, vector<8x8xbf16>, vector<8x8xf32> -> vector<8x8xf32>
    %cst_37 = arith.constant 0.353553385 : f32
    %113 = vector.broadcast %cst_37 : f32 to vector<8x8xf32>
    %114 = arith.mulf %112, %113 : vector<8x8xf32>
    %115 = arith.addf %114, %4 : vector<8x8xf32>
    %cst_38 = arith.constant dense<0xFF800000> : vector<8xf32>
    %116 = vector.multi_reduction <maximumf>, %115, %cst_38 [1] : vector<8x8xf32> to vector<8xf32>
    %117 = vector.shape_cast %116 : vector<8xf32> to vector<8x1xf32>
    %118 = vector.broadcast %117 : vector<8x1xf32> to vector<8x8xf32>
    %119 = arith.subf %115, %118 : vector<8x8xf32>
    %120 = math.exp %119 : vector<8x8xf32>
    %cst_39 = arith.constant dense<0.000000e+00> : vector<8xf32>
    %121 = vector.multi_reduction <add>, %120, %cst_39 [1] : vector<8x8xf32> to vector<8xf32>
    %122 = vector.shape_cast %121 : vector<8xf32> to vector<8x1xf32>
    %123 = tpu.reciprocal %122 {approx = true} : vector<8x1xf32> -> vector<8x1xf32>
    %124 = vector.broadcast %123 : vector<8x1xf32> to vector<8x8xf32>
    %125 = arith.mulf %120, %124 : vector<8x8xf32>
    %126 = arith.truncf %125 : vector<8x8xf32> to vector<8x8xbf16>
    %cst_40 = arith.constant dense<0.000000e+00> : vector<8x8xf32>
    %127 = tpu.matmul %126, %111, %cst_40 {dimension_numbers = #tpu.dot_dimension_numbers<[1], [0], [0], [1], [0, 0, 1, 1], [], []>} : vector<8x8xbf16>, vector<8x8xbf16>, vector<8x8xf32> -> vector<8x8xf32>
    %128 = tpu.concatenate %61, %83, %105, %127 in 1 : vector<8x8xf32>, vector<8x8xf32>, vector<8x8xf32>, vector<8x8xf32> -> vector<8x32xf32>
    %c0_41 = arith.constant 0 : index
    %c0_42 = arith.constant 0 : index
    %c0_43 = arith.constant 0 : index
    %129 = vector.load %arg13[%c0_41, %c0_42, %c0_43] : memref<1x32x32xbf16, #tpu.memory_space<vmem>>, vector<1x32x32xbf16>
    %130 = vector.shape_cast %129 : vector<1x32x32xbf16> to vector<32x32xbf16>
    %131 = arith.truncf %128 : vector<8x32xf32> to vector<8x32xbf16>
    %cst_44 = arith.constant dense<0.000000e+00> : vector<8x32xf32>
    %132 = tpu.matmul %131, %130, %cst_44 {dimension_numbers = #tpu.dot_dimension_numbers<[1], [0], [0], [1], [0, 0, 1, 1], [], []>} : vector<8x32xbf16>, vector<32x32xbf16>, vector<8x32xf32> -> vector<8x32xf32>
    %c0_45 = arith.constant 0 : index
    %c0_46 = arith.constant 0 : index
    %c0_47 = arith.constant 0 : index
    %133 = vector.load %arg14[%c0_45, %c0_46, %c0_47] : memref<1x1x32xf32, #tpu.memory_space<vmem>>, vector<1x1x32xf32>
    %134 = vector.shape_cast %133 : vector<1x1x32xf32> to vector<1x32xf32>
    %135 = vector.broadcast %134 : vector<1x32xf32> to vector<8x32xf32>
    %136 = arith.addf %132, %135 : vector<8x32xf32>
    %137 = arith.addf %3, %136 : vector<8x32xf32>
    %c0_48 = arith.constant 0 : index
    %c0_49 = arith.constant 0 : index
    %c0_50 = arith.constant 0 : index
    %138 = vector.load %arg21[%c0_48, %c0_49, %c0_50] : memref<1x1x32xf32, #tpu.memory_space<vmem>>, vector<1x1x32xf32>
    %139 = vector.shape_cast %138 : vector<1x1x32xf32> to vector<1x32xf32>
    %c0_51 = arith.constant 0 : index
    %c0_52 = arith.constant 0 : index
    %c0_53 = arith.constant 0 : index
    %140 = vector.load %arg22[%c0_51, %c0_52, %c0_53] : memref<1x1x32xf32, #tpu.memory_space<vmem>>, vector<1x1x32xf32>
    %141 = vector.shape_cast %140 : vector<1x1x32xf32> to vector<1x32xf32>
    %cst_54 = arith.constant dense<0.000000e+00> : vector<8xf32>
    %142 = vector.multi_reduction <add>, %137, %cst_54 [1] : vector<8x32xf32> to vector<8xf32>
    %143 = vector.shape_cast %142 : vector<8xf32> to vector<8x1xf32>
    %cst_55 = arith.constant 3.200000e+01 : f32
    %144 = vector.broadcast %cst_55 : f32 to vector<8x1xf32>
    %145 = arith.divf %143, %144 : vector<8x1xf32>
    %146 = vector.broadcast %145 : vector<8x1xf32> to vector<8x32xf32>
    %147 = arith.subf %137, %146 : vector<8x32xf32>
    %148 = arith.mulf %147, %147 : vector<8x32xf32>
    %cst_56 = arith.constant dense<0.000000e+00> : vector<8xf32>
    %149 = vector.multi_reduction <add>, %148, %cst_56 [1] : vector<8x32xf32> to vector<8xf32>
    %150 = vector.shape_cast %149 : vector<8xf32> to vector<8x1xf32>
    %cst_57 = arith.constant 3.200000e+01 : f32
    %151 = vector.broadcast %cst_57 : f32 to vector<8x1xf32>
    %152 = arith.divf %150, %151 : vector<8x1xf32>
    %cst_58 = arith.constant 9.99999974E-6 : f32
    %153 = vector.broadcast %cst_58 : f32 to vector<8x1xf32>
    %154 = arith.addf %152, %153 : vector<8x1xf32>
    %155 = math.rsqrt %154 : vector<8x1xf32>
    %156 = vector.broadcast %155 : vector<8x1xf32> to vector<8x32xf32>
    %157 = arith.mulf %147, %156 : vector<8x32xf32>
    %158 = vector.broadcast %139 : vector<1x32xf32> to vector<8x32xf32>
    %159 = arith.mulf %157, %158 : vector<8x32xf32>
    %160 = vector.broadcast %141 : vector<1x32xf32> to vector<8x32xf32>
    %161 = arith.addf %159, %160 : vector<8x32xf32>
    %c0_59 = arith.constant 0 : index
    %c0_60 = arith.constant 0 : index
    %c0_61 = arith.constant 0 : index
    %162 = vector.load %arg17[%c0_59, %c0_60, %c0_61] : memref<1x32x128xbf16, #tpu.memory_space<vmem>>, vector<1x32x128xbf16>
    %163 = vector.shape_cast %162 : vector<1x32x128xbf16> to vector<32x128xbf16>
    %164 = arith.truncf %161 : vector<8x32xf32> to vector<8x32xbf16>
    %cst_62 = arith.constant dense<0.000000e+00> : vector<8x128xf32>
    %165 = tpu.matmul %164, %163, %cst_62 {dimension_numbers = #tpu.dot_dimension_numbers<[1], [0], [0], [1], [0, 0, 1, 1], [], []>} : vector<8x32xbf16>, vector<32x128xbf16>, vector<8x128xf32> -> vector<8x128xf32>
    %c0_63 = arith.constant 0 : index
    %c0_64 = arith.constant 0 : index
    %c0_65 = arith.constant 0 : index
    %166 = vector.load %arg18[%c0_63, %c0_64, %c0_65] : memref<1x1x128xf32, #tpu.memory_space<vmem>>, vector<1x1x128xf32>
    %167 = vector.shape_cast %166 : vector<1x1x128xf32> to vector<1x128xf32>
    %168 = vector.broadcast %167 : vector<1x128xf32> to vector<8x128xf32>
    %169 = arith.addf %165, %168 : vector<8x128xf32>
    %cst_66 = arith.constant 0.000000e+00 : f32
    %170 = vector.broadcast %cst_66 : f32 to vector<8x128xf32>
    %171 = arith.maximumf %169, %170 : vector<8x128xf32>
    %c0_67 = arith.constant 0 : index
    %c0_68 = arith.constant 0 : index
    %c0_69 = arith.constant 0 : index
    %172 = vector.load %arg19[%c0_67, %c0_68, %c0_69] : memref<1x128x32xbf16, #tpu.memory_space<vmem>>, vector<1x128x32xbf16>
    %173 = vector.shape_cast %172 : vector<1x128x32xbf16> to vector<128x32xbf16>
    %174 = arith.truncf %171 : vector<8x128xf32> to vector<8x128xbf16>
    %cst_70 = arith.constant dense<0.000000e+00> : vector<8x32xf32>
    %175 = tpu.matmul %174, %173, %cst_70 {dimension_numbers = #tpu.dot_dimension_numbers<[1], [0], [0], [1], [0, 0, 1, 1], [], []>} : vector<8x128xbf16>, vector<128x32xbf16>, vector<8x32xf32> -> vector<8x32xf32>
    %c0_71 = arith.constant 0 : index
    %c0_72 = arith.constant 0 : index
    %c0_73 = arith.constant 0 : index
    %176 = vector.load %arg20[%c0_71, %c0_72, %c0_73] : memref<1x1x32xf32, #tpu.memory_space<vmem>>, vector<1x1x32xf32>
    %177 = vector.shape_cast %176 : vector<1x1x32xf32> to vector<1x32xf32>
    %178 = vector.broadcast %177 : vector<1x32xf32> to vector<8x32xf32>
    %179 = arith.addf %175, %178 : vector<8x32xf32>
    %180 = arith.addf %137, %179 : vector<8x32xf32>
    %c0_74 = arith.constant 0 : index
    %c0_75 = arith.constant 0 : index
    %181 = vector.load %arg28[%c0_74, %c0_75] : memref<8x32xf32, #tpu.memory_space<vmem>>, vector<8x32xf32>
    tpu.vector_store %arg28[%c0_74, %c0_75], %180 {strides = array<i32>} : memref<8x32xf32, #tpu.memory_space<vmem>>, vector<8x32xf32>,
    %c1_i32 = arith.constant 1 : i32
    %182 = arith.cmpi eq, %arg1, %c1_i32 : i32
    %183 = arith.extui %182 : i1 to i32
    %c0_i32_76 = arith.constant 0 : i32
    %184 = arith.cmpi ne, %183, %c0_i32_76 : i32
    scf.if %184 {
      %c0_77 = arith.constant 0 : index
      %c0_78 = arith.constant 0 : index
      %185 = vector.load %arg23[%c0_77, %c0_78] : memref<1x32xf32, #tpu.memory_space<vmem>>, vector<1x32xf32>
      %c0_79 = arith.constant 0 : index
      %c0_80 = arith.constant 0 : index
      %186 = vector.load %arg24[%c0_79, %c0_80] : memref<1x32xf32, #tpu.memory_space<vmem>>, vector<1x32xf32>
      %cst_81 = arith.constant dense<0.000000e+00> : vector<8xf32>
      %187 = vector.multi_reduction <add>, %180, %cst_81 [1] : vector<8x32xf32> to vector<8xf32>
      %188 = vector.shape_cast %187 : vector<8xf32> to vector<8x1xf32>
      %cst_82 = arith.constant 3.200000e+01 : f32
      %189 = vector.broadcast %cst_82 : f32 to vector<8x1xf32>
      %190 = arith.divf %188, %189 : vector<8x1xf32>
      %191 = vector.broadcast %190 : vector<8x1xf32> to vector<8x32xf32>
      %192 = arith.subf %180, %191 : vector<8x32xf32>
      %193 = arith.mulf %192, %192 : vector<8x32xf32>
      %cst_83 = arith.constant dense<0.000000e+00> : vector<8xf32>
      %194 = vector.multi_reduction <add>, %193, %cst_83 [1] : vector<8x32xf32> to vector<8xf32>
      %195 = vector.shape_cast %194 : vector<8xf32> to vector<8x1xf32>
      %cst_84 = arith.constant 3.200000e+01 : f32
      %196 = vector.broadcast %cst_84 : f32 to vector<8x1xf32>
      %197 = arith.divf %195, %196 : vector<8x1xf32>
      %cst_85 = arith.constant 9.99999974E-6 : f32
      %198 = vector.broadcast %cst_85 : f32 to vector<8x1xf32>
      %199 = arith.addf %197, %198 : vector<8x1xf32>
      %200 = math.rsqrt %199 : vector<8x1xf32>
      %201 = vector.broadcast %200 : vector<8x1xf32> to vector<8x32xf32>
      %202 = arith.mulf %192, %201 : vector<8x32xf32>
      %203 = vector.broadcast %185 : vector<1x32xf32> to vector<8x32xf32>
      %204 = arith.mulf %202, %203 : vector<8x32xf32>
      %205 = vector.broadcast %186 : vector<1x32xf32> to vector<8x32xf32>
      %206 = arith.addf %204, %205 : vector<8x32xf32>
      %c0_86 = arith.constant 0 : index
      %c0_87 = arith.constant 0 : index
      %207 = vector.load %arg25[%c0_86, %c0_87] : memref<32x8xbf16, #tpu.memory_space<vmem>>, vector<32x8xbf16>
      %208 = arith.truncf %206 : vector<8x32xf32> to vector<8x32xbf16>
      %cst_88 = arith.constant dense<0.000000e+00> : vector<8x8xf32>
      %209 = tpu.matmul %208, %207, %cst_88 {dimension_numbers = #tpu.dot_dimension_numbers<[1], [0], [0], [1], [0, 0, 1, 1], [], []>} : vector<8x32xbf16>, vector<32x8xbf16>, vector<8x8xf32> -> vector<8x8xf32>
      %c0_89 = arith.constant 0 : index
      %c0_90 = arith.constant 0 : index
      %210 = vector.load %arg26[%c0_89, %c0_90] : memref<1x8xf32, #tpu.memory_space<vmem>>, vector<1x8xf32>
      %211 = vector.broadcast %210 : vector<1x8xf32> to vector<8x8xf32>
      %212 = arith.addf %209, %211 : vector<8x8xf32>
      %cst_91 = arith.constant dense<0xFF800000> : vector<8xf32>
      %213 = vector.multi_reduction <maximumf>, %212, %cst_91 [1] : vector<8x8xf32> to vector<8xf32>
      %214 = vector.shape_cast %213 : vector<8xf32> to vector<8x1xf32>
      %215 = vector.broadcast %214 : vector<8x1xf32> to vector<8x8xf32>
      %216 = arith.subf %212, %215 : vector<8x8xf32>
      %217 = math.exp %216 : vector<8x8xf32>
      %cst_92 = arith.constant dense<0.000000e+00> : vector<8xf32>
      %218 = vector.multi_reduction <add>, %217, %cst_92 [1] : vector<8x8xf32> to vector<8xf32>
      %219 = vector.shape_cast %218 : vector<8xf32> to vector<8x1xf32>
      %220 = vector.broadcast %219 : vector<8x1xf32> to vector<8x8xf32>
      %221 = arith.divf %217, %220 : vector<8x8xf32>
      %c0_93 = arith.constant 0 : index
      %c0_94 = arith.constant 0 : index
      %222 = vector.load %arg27[%c0_93, %c0_94] : memref<8x8xf32, #tpu.memory_space<vmem>>, vector<8x8xf32>
      tpu.vector_store %arg27[%c0_93, %c0_94], %221 {strides = array<i32>} : memref<8x8xf32, #tpu.memory_space<vmem>>, vector<8x8xf32>,
    } else {
    }
    return
  }
  func.func @transform_0(%arg0: i32, %arg1: i32) -> (i32, i32) {
    %c0_i32 = arith.constant 0 : i32
    %c0_i32_0 = arith.constant 0 : i32
    return %arg0, %c0_i32 : i32, i32
  }
  func.func @transform_1(%arg0: i32, %arg1: i32) -> (i32, i32) {
    %c0_i32 = arith.constant 0 : i32
    %c0_i32_0 = arith.constant 0 : i32
    %c0_i32_1 = arith.constant 0 : i32
    return %c0_i32, %c0_i32_0 : i32, i32
  }
  func.func @transform_2(%arg0: i32, %arg1: i32) -> (i32, i32) {
    %c0_i32 = arith.constant 0 : i32
    %c0_i32_0 = arith.constant 0 : i32
    %c0_i32_1 = arith.constant 0 : i32
    return %c0_i32, %c0_i32_0 : i32, i32
  }
  func.func @transform_3(%arg0: i32, %arg1: i32) -> (i32, i32) {
    %c0_i32 = arith.constant 0 : i32
    %c0_i32_0 = arith.constant 0 : i32
    %c0_i32_1 = arith.constant 0 : i32
    return %c0_i32, %c0_i32_0 : i32, i32
  }
  func.func @transform_4(%arg0: i32, %arg1: i32) -> (i32, i32) {
    %c0_i32 = arith.constant 0 : i32
    %c0_i32_0 = arith.constant 0 : i32
    %c0_i32_1 = arith.constant 0 : i32
    return %c0_i32, %c0_i32_0 : i32, i32
  }
  func.func @transform_5(%arg0: i32, %arg1: i32) -> (i32, i32) {
    %c0_i32 = arith.constant 0 : i32
    %c0_i32_0 = arith.constant 0 : i32
    %c0_i32_1 = arith.constant 0 : i32
    return %c0_i32, %c0_i32_0 : i32, i32
  }
  func.func @transform_6(%arg0: i32, %arg1: i32) -> (i32, i32) {
    %c0_i32 = arith.constant 0 : i32
    %c0_i32_0 = arith.constant 0 : i32
    %c0_i32_1 = arith.constant 0 : i32
    return %c0_i32, %c0_i32_0 : i32, i32
  }
  func.func @transform_7(%arg0: i32, %arg1: i32) -> (i32, i32) {
    %c0_i32 = arith.constant 0 : i32
    %c0_i32_0 = arith.constant 0 : i32
    %c0_i32_1 = arith.constant 0 : i32
    return %c0_i32, %c0_i32_0 : i32, i32
  }
  func.func @transform_8(%arg0: i32, %arg1: i32) -> (i32, i32) {
    %c0_i32 = arith.constant 0 : i32
    %c0_i32_0 = arith.constant 0 : i32
    %c0_i32_1 = arith.constant 0 : i32
    return %c0_i32, %c0_i32_0 : i32, i32
  }
  func.func @transform_9(%arg0: i32, %arg1: i32) -> (i32, i32, i32) {
    %c0_i32 = arith.constant 0 : i32
    %c0_i32_0 = arith.constant 0 : i32
    %c0_i32_1 = arith.constant 0 : i32
    return %arg1, %c0_i32, %c0_i32_0 : i32, i32, i32
  }
  func.func @transform_10(%arg0: i32, %arg1: i32) -> (i32, i32, i32) {
    %c0_i32 = arith.constant 0 : i32
    %c0_i32_0 = arith.constant 0 : i32
    %c0_i32_1 = arith.constant 0 : i32
    return %arg1, %c0_i32, %c0_i32_0 : i32, i32, i32
  }
  func.func @transform_11(%arg0: i32, %arg1: i32) -> (i32, i32, i32) {
    %c0_i32 = arith.constant 0 : i32
    %c0_i32_0 = arith.constant 0 : i32
    %c0_i32_1 = arith.constant 0 : i32
    return %arg1, %c0_i32, %c0_i32_0 : i32, i32, i32
  }
  func.func @transform_12(%arg0: i32, %arg1: i32) -> (i32, i32, i32) {
    %c0_i32 = arith.constant 0 : i32
    %c0_i32_0 = arith.constant 0 : i32
    %c0_i32_1 = arith.constant 0 : i32
    return %arg1, %c0_i32, %c0_i32_0 : i32, i32, i32
  }
  func.func @transform_13(%arg0: i32, %arg1: i32) -> (i32, i32, i32) {
    %c0_i32 = arith.constant 0 : i32
    %c0_i32_0 = arith.constant 0 : i32
    %c0_i32_1 = arith.constant 0 : i32
    return %arg1, %c0_i32, %c0_i32_0 : i32, i32, i32
  }
  func.func @transform_14(%arg0: i32, %arg1: i32) -> (i32, i32, i32) {
    %c0_i32 = arith.constant 0 : i32
    %c0_i32_0 = arith.constant 0 : i32
    %c0_i32_1 = arith.constant 0 : i32
    return %arg1, %c0_i32, %c0_i32_0 : i32, i32, i32
  }
  func.func @transform_15(%arg0: i32, %arg1: i32) -> (i32, i32, i32) {
    %c0_i32 = arith.constant 0 : i32
    %c0_i32_0 = arith.constant 0 : i32
    %c0_i32_1 = arith.constant 0 : i32
    return %arg1, %c0_i32, %c0_i32_0 : i32, i32, i32
  }
  func.func @transform_16(%arg0: i32, %arg1: i32) -> (i32, i32, i32) {
    %c0_i32 = arith.constant 0 : i32
    %c0_i32_0 = arith.constant 0 : i32
    %c0_i32_1 = arith.constant 0 : i32
    return %arg1, %c0_i32, %c0_i32_0 : i32, i32, i32
  }
  func.func @transform_17(%arg0: i32, %arg1: i32) -> (i32, i32, i32) {
    %c0_i32 = arith.constant 0 : i32
    %c0_i32_0 = arith.constant 0 : i32
    %c0_i32_1 = arith.constant 0 : i32
    return %arg1, %c0_i32, %c0_i32_0 : i32, i32, i32
  }
  func.func @transform_18(%arg0: i32, %arg1: i32) -> (i32, i32, i32) {
    %c0_i32 = arith.constant 0 : i32
    %c0_i32_0 = arith.constant 0 : i32
    %c0_i32_1 = arith.constant 0 : i32
    return %arg1, %c0_i32, %c0_i32_0 : i32, i32, i32
  }
  func.func @transform_19(%arg0: i32, %arg1: i32) -> (i32, i32, i32) {
    %c0_i32 = arith.constant 0 : i32
    %c0_i32_0 = arith.constant 0 : i32
    %c0_i32_1 = arith.constant 0 : i32
    return %arg1, %c0_i32, %c0_i32_0 : i32, i32, i32
  }
  func.func @transform_20(%arg0: i32, %arg1: i32) -> (i32, i32, i32) {
    %c0_i32 = arith.constant 0 : i32
    %c0_i32_0 = arith.constant 0 : i32
    %c0_i32_1 = arith.constant 0 : i32
    return %arg1, %c0_i32, %c0_i32_0 : i32, i32, i32
  }
  func.func @transform_21(%arg0: i32, %arg1: i32) -> (i32, i32) {
    %c0_i32 = arith.constant 0 : i32
    %c0_i32_0 = arith.constant 0 : i32
    %c0_i32_1 = arith.constant 0 : i32
    return %c0_i32, %c0_i32_0 : i32, i32
  }
  func.func @transform_22(%arg0: i32, %arg1: i32) -> (i32, i32) {
    %c0_i32 = arith.constant 0 : i32
    %c0_i32_0 = arith.constant 0 : i32
    %c0_i32_1 = arith.constant 0 : i32
    return %c0_i32, %c0_i32_0 : i32, i32
  }
  func.func @transform_23(%arg0: i32, %arg1: i32) -> (i32, i32) {
    %c0_i32 = arith.constant 0 : i32
    %c0_i32_0 = arith.constant 0 : i32
    %c0_i32_1 = arith.constant 0 : i32
    return %c0_i32, %c0_i32_0 : i32, i32
  }
  func.func @transform_24(%arg0: i32, %arg1: i32) -> (i32, i32) {
    %c0_i32 = arith.constant 0 : i32
    %c0_i32_0 = arith.constant 0 : i32
    %c0_i32_1 = arith.constant 0 : i32
    return %c0_i32, %c0_i32_0 : i32, i32
  }
  func.func @transform_25(%arg0: i32, %arg1: i32) -> (i32, i32) {
    %c0_i32 = arith.constant 0 : i32
    %c0_i32_0 = arith.constant 0 : i32
    return %arg0, %c0_i32 : i32, i32
  }
}

</mosaic_0001>

<llo_original>
// kernel: tpu_custom_call.1
$region0: #{tpu_custom_call.1}
  #allocation0 [shape = 'u32[]', space=smem, size = 0x4, offset = 0x4, fixed_abs, tag = 'smem constant byte address 0x4 - core index']
  #allocation1 [shape = 'u32[144,128]{1,0:T(1,128)}', space=vmem, size = 0x12000, scoped, tag = 'internal scratch']
  #allocation2 [shape = 'f32[8,32]{1,0:T(8,128)}', space=vmem, size = 0x1000, scoped, tag = 'scratch operand']
  %s0 = inlined_call_operand.vmem [shape: f32[16,6], index: 0, kind: input, shape index: {}]
  %s1 = inlined_call_operand.vmem [shape: f32[8,32], index: 1, kind: input, shape index: {}]
  %s2 = inlined_call_operand.vmem [shape: f32[8,8], index: 2, kind: input, shape index: {}]
  %s3 = inlined_call_operand.vmem [shape: bf16[6,96], index: 3, kind: input, shape index: {}]
  %s4 = inlined_call_operand.vmem [shape: f32[1,96], index: 4, kind: input, shape index: {}]
  %s5 = inlined_call_operand.vmem [shape: bf16[96,96], index: 5, kind: input, shape index: {}]
  %s6 = inlined_call_operand.vmem [shape: f32[1,96], index: 6, kind: input, shape index: {}]
  %s7 = inlined_call_operand.vmem [shape: bf16[96,32], index: 7, kind: input, shape index: {}]
  %s8 = inlined_call_operand.vmem [shape: f32[1,32], index: 8, kind: input, shape index: {}]
  %s9 = inlined_call_operand.vmem [shape: bf16[2,32,96], index: 9, kind: input, shape index: {}]
  %s10 = inlined_call_operand.vmem [shape: f32[2,1,96], index: 10, kind: input, shape index: {}]
  %s11 = inlined_call_operand.vmem [shape: bf16[2,32,32], index: 11, kind: input, shape index: {}]
  %s12 = inlined_call_operand.vmem [shape: f32[2,1,32], index: 12, kind: input, shape index: {}]
  %s13 = inlined_call_operand.vmem [shape: f32[2,1,32], index: 13, kind: input, shape index: {}]
  %s14 = inlined_call_operand.vmem [shape: f32[2,1,32], index: 14, kind: input, shape index: {}]
  %s15 = inlined_call_operand.vmem [shape: bf16[2,32,128], index: 15, kind: input, shape index: {}]
  %s16 = inlined_call_operand.vmem [shape: f32[2,1,128], index: 16, kind: input, shape index: {}]
  %s17 = inlined_call_operand.vmem [shape: bf16[2,128,32], index: 17, kind: input, shape index: {}]
  %s18 = inlined_call_operand.vmem [shape: f32[2,1,32], index: 18, kind: input, shape index: {}]
  %s19 = inlined_call_operand.vmem [shape: f32[2,1,32], index: 19, kind: input, shape index: {}]
  %s20 = inlined_call_operand.vmem [shape: f32[2,1,32], index: 20, kind: input, shape index: {}]
  %s21 = inlined_call_operand.vmem [shape: f32[1,32], index: 21, kind: input, shape index: {}]
  %s22 = inlined_call_operand.vmem [shape: f32[1,32], index: 22, kind: input, shape index: {}]
  %s23 = inlined_call_operand.vmem [shape: bf16[32,8], index: 23, kind: input, shape index: {}]
  %s24 = inlined_call_operand.vmem [shape: f32[1,8], index: 24, kind: input, shape index: {}]
  %s25 = inlined_call_operand.vmem [shape: f32[16,8], index: 25, kind: output, shape index: {}]
  %s26 = sld [smem:[#allocation0]]
  $region141: #{tpu_custom_call.1} parent=0
    _
  %s28 = ssub.s32 1, %s26
  %s29 = scalar_select 0, %s28, %s26
  loop: start=0, step=1, limit=6
  $region2: #{tpu_custom_call.1} parent=0 // loop_pre_header
    _
  $region3: #{tpu_custom_call.1} parent=0 // loop_header
    %s31 = sphi 0, %s35
    %p32 = scmp.ge.s32.totalorder %s31, 6
    %s38 = sphi 0, %s50
    %s39 = sphi 0, %s46
    %s40 = sphi 0, %s38
    %s41 = sphi 0, %s39
    %s42 = sphi 0, %s40
    %s43 = sphi 0, %s41
    %s53 = sphi 0, %s55
    %s56 = sphi 0, %s53
    %s57 = sphi 0, %s56
    %s73 = sphi 0, %s57
    %s77 = sphi 0, %s77
    %s79 = sphi 0, %s77
    %s80 = sphi 0, %s79
    %s94 = sphi 0, %s80
    %s98 = sphi 0, %s98
    %s100 = sphi 0, %s98
    %s101 = sphi 0, %s100
    %s115 = sphi 0, %s101
    %s119 = sphi 0, %s119
    %s121 = sphi 0, %s119
    %s122 = sphi 0, %s121
    %s136 = sphi 0, %s122
    %s140 = sphi 0, %s140
    %s142 = sphi 0, %s140
    %s143 = sphi 0, %s142
    %s157 = sphi 0, %s143
    %s161 = sphi 0, %s161
    %s163 = sphi 0, %s161
    %s164 = sphi 0, %s163
    %s178 = sphi 0, %s164
    %s182 = sphi 0, %s182
    %s184 = sphi 0, %s182
    %s185 = sphi 0, %s184
    %s199 = sphi 0, %s185
    %s203 = sphi 0, %s203
    %s205 = sphi 0, %s203
    %s206 = sphi 0, %s205
    %s220 = sphi 0, %s206
    %s224 = sphi 0, %s224
    %s226 = sphi 0, %s224
    %s227 = sphi 0, %s226
    %s241 = sphi 0, %s227
    %s247 = sphi 0, %s249
    %s250 = sphi 0, %s247
    %s251 = sphi 0, %s250
    %s267 = sphi 0, %s251
    %s273 = sphi 0, %s275
    %s276 = sphi 0, %s273
    %s277 = sphi 0, %s276
    %s293 = sphi 0, %s277
    %s299 = sphi 0, %s301
    %s302 = sphi 0, %s299
    %s303 = sphi 0, %s302
    %s319 = sphi 0, %s303
    %s325 = sphi 0, %s327
    %s328 = sphi 0, %s325
    %s329 = sphi 0, %s328
    %s345 = sphi 0, %s329
    %s351 = sphi 0, %s353
    %s354 = sphi 0, %s351
    %s355 = sphi 0, %s354
    %s371 = sphi 0, %s355
    %s377 = sphi 0, %s379
    %s380 = sphi 0, %s377
    %s381 = sphi 0, %s380
    %s397 = sphi 0, %s381
    %s403 = sphi 0, %s405
    %s406 = sphi 0, %s403
    %s407 = sphi 0, %s406
    %s423 = sphi 0, %s407
    %s429 = sphi 0, %s431
    %s432 = sphi 0, %s429
    %s433 = sphi 0, %s432
    %s449 = sphi 0, %s433
    %s455 = sphi 0, %s457
    %s458 = sphi 0, %s455
    %s459 = sphi 0, %s458
    %s475 = sphi 0, %s459
    %s481 = sphi 0, %s483
    %s484 = sphi 0, %s481
    %s485 = sphi 0, %s484
    %s501 = sphi 0, %s485
    %s507 = sphi 0, %s509
    %s510 = sphi 0, %s507
    %s511 = sphi 0, %s510
    %s527 = sphi 0, %s511
    %s533 = sphi 0, %s535
    %s536 = sphi 0, %s533
    %s537 = sphi 0, %s536
    %s553 = sphi 0, %s537
    %s557 = sphi 0, %s557
    %s559 = sphi 0, %s557
    %s560 = sphi 0, %s559
    %s574 = sphi 0, %s560
    %s578 = sphi 0, %s578
    %s580 = sphi 0, %s578
    %s581 = sphi 0, %s580
    %s595 = sphi 0, %s581
    %s599 = sphi 0, %s599
    %s601 = sphi 0, %s599
    %s602 = sphi 0, %s601
    %s616 = sphi 0, %s602
    %s620 = sphi 0, %s620
    %s622 = sphi 0, %s620
    %s623 = sphi 0, %s622
    %s637 = sphi 0, %s623
    %s643 = sphi 0, %s645
    %s646 = sphi 0, %s643
    %s647 = sphi 0, %s646
    %s663 = sphi 0, %s647
  $region4: #{tpu_custom_call.1} parent=0 // loop_header_branch
    %34 = sbr.rel (%p32) target = $region8
  $region5: #{tpu_custom_call.1} parent=0 // loop_body
    %s36 = ssub.s32 %s31, 1
    %s37 = ssub.s32 %s31, 2
    %s44 = sadd.s32 1, %s39
    %p45 = scmp.ge.s32.totalorder %s44, 2
    %s46 = scalar_select %p45, 0, %s44
    %s47 = sadd.s32 1, %s38
    %s48 = scalar_select %p45, %s47, %s38
    %p49 = scmp.ge.s32.totalorder %s48, 2
    %s50 = scalar_select %p49, 0, %s48
    %s51 = ssub.s32 %s38, %s50
    %p52 = scmp.eq.s32.totalorder %s51, 0
    %s54 = sadd.s32 %s53, 1
    %s55 = scalar_select %p52, %s53, %s54
    %p58 = pneg %p52
    %p59 = scmp.eq.s32.totalorder %s31, 3
    %p60 = por %p58, %p59
    %p61 = scmp.ne.s32.totalorder %s53, %s56
    %p62 = scmp.eq.s32.totalorder %s31, 0
    %p63 = por %p61, %p62
    %p64 = scmp.ne.s32.totalorder %s53, %s56
    %p65 = scmp.eq.s32.totalorder %s36, 3
    %p66 = por %p64, %p65
    %p67 = scmp.ne.s32.totalorder %s56, %s57
    %p68 = scmp.eq.s32.totalorder %s36, 0
    %p69 = por %p67, %p68
    %p70 = scmp.ne.s32.totalorder %s56, %s57
    %p71 = scmp.eq.s32.totalorder %s37, 3
    %p72 = por %p70, %p71
    %p74 = scmp.ne.s32.totalorder %s57, %s73
    %p75 = scmp.eq.s32.totalorder %s37, 0
    %p76 = por %p74, %p75
    %s78 = sadd.s32 %s77, 1
    %p81 = scmp.eq.s32.totalorder %s31, 3
    %p82 = scmp.ne.s32.totalorder %s77, %s79
    %p83 = scmp.eq.s32.totalorder %s31, 0
    %p84 = por %p82, %p83
    %p85 = scmp.ne.s32.totalorder %s77, %s79
    %p86 = scmp.eq.s32.totalorder %s36, 3
    %p87 = por %p85, %p86
    %p88 = scmp.ne.s32.totalorder %s79, %s80
    %p89 = scmp.eq.s32.totalorder %s36, 0
    %p90 = por %p88, %p89
    %p91 = scmp.ne.s32.totalorder %s79, %s80
    %p92 = scmp.eq.s32.totalorder %s37, 3
    %p93 = por %p91, %p92
    %p95 = scmp.ne.s32.totalorder %s80, %s94
    %p96 = scmp.eq.s32.totalorder %s37, 0
    %p97 = por %p95, %p96
    %s99 = sadd.s32 %s98, 1
    %p102 = scmp.eq.s32.totalorder %s31, 3
    %p103 = scmp.ne.s32.totalorder %s98, %s100
    %p104 = scmp.eq.s32.totalorder %s31, 0
    %p105 = por %p103, %p104
    %p106 = scmp.ne.s32.totalorder %s98, %s100
    %p107 = scmp.eq.s32.totalorder %s36, 3
    %p108 = por %p106, %p107
    %p109 = scmp.ne.s32.totalorder %s100, %s101
    %p110 = scmp.eq.s32.totalorder %s36, 0
    %p111 = por %p109, %p110
    %p112 = scmp.ne.s32.totalorder %s100, %s101
    %p113 = scmp.eq.s32.totalorder %s37, 3
    %p114 = por %p112, %p113
    %p116 = scmp.ne.s32.totalorder %s101, %s115
    %p117 = scmp.eq.s32.totalorder %s37, 0
    %p118 = por %p116, %p117
    %s120 = sadd.s32 %s119, 1
    %p123 = scmp.eq.s32.totalorder %s31, 3
    %p124 = scmp.ne.s32.totalorder %s119, %s121
    %p125 = scmp.eq.s32.totalorder %s31, 0
    %p126 = por %p124, %p125
    %p127 = scmp.ne.s32.totalorder %s119, %s121
    %p128 = scmp.eq.s32.totalorder %s36, 3
    %p129 = por %p127, %p128
    %p130 = scmp.ne.s32.totalorder %s121, %s122
    %p131 = scmp.eq.s32.totalorder %s36, 0
    %p132 = por %p130, %p131
    %p133 = scmp.ne.s32.totalorder %s121, %s122
    %p134 = scmp.eq.s32.totalorder %s37, 3
    %p135 = por %p133, %p134
    %p137 = scmp.ne.s32.totalorder %s122, %s136
    %p138 = scmp.eq.s32.totalorder %s37, 0
    %p139 = por %p137, %p138
    %s141 = sadd.s32 %s140, 1
    %p144 = scmp.eq.s32.totalorder %s31, 3
    %p145 = scmp.ne.s32.totalorder %s140, %s142
    %p146 = scmp.eq.s32.totalorder %s31, 0
    %p147 = por %p145, %p146
    %p148 = scmp.ne.s32.totalorder %s140, %s142
    %p149 = scmp.eq.s32.totalorder %s36, 3
    %p150 = por %p148, %p149
    %p151 = scmp.ne.s32.totalorder %s142, %s143
    %p152 = scmp.eq.s32.totalorder %s36, 0
    %p153 = por %p151, %p152
    %p154 = scmp.ne.s32.totalorder %s142, %s143
    %p155 = scmp.eq.s32.totalorder %s37, 3
    %p156 = por %p154, %p155
    %p158 = scmp.ne.s32.totalorder %s143, %s157
    %p159 = scmp.eq.s32.totalorder %s37, 0
    %p160 = por %p158, %p159
    %s162 = sadd.s32 %s161, 1
    %p165 = scmp.eq.s32.totalorder %s31, 3
    %p166 = scmp.ne.s32.totalorder %s161, %s163
    %p167 = scmp.eq.s32.totalorder %s31, 0
    %p168 = por %p166, %p167
    %p169 = scmp.ne.s32.totalorder %s161, %s163
    %p170 = scmp.eq.s32.totalorder %s36, 3
    %p171 = por %p169, %p170
    %p172 = scmp.ne.s32.totalorder %s163, %s164
    %p173 = scmp.eq.s32.totalorder %s36, 0
    %p174 = por %p172, %p173
    %p175 = scmp.ne.s32.totalorder %s163, %s164
    %p176 = scmp.eq.s32.totalorder %s37, 3
    %p177 = por %p175, %p176
    %p179 = scmp.ne.s32.totalorder %s164, %s178
    %p180 = scmp.eq.s32.totalorder %s37, 0
    %p181 = por %p179, %p180
    %s183 = sadd.s32 %s182, 1
    %p186 = scmp.eq.s32.totalorder %s31, 3
    %p187 = scmp.ne.s32.totalorder %s182, %s184
    %p188 = scmp.eq.s32.totalorder %s31, 0
    %p189 = por %p187, %p188
    %p190 = scmp.ne.s32.totalorder %s182, %s184
    %p191 = scmp.eq.s32.totalorder %s36, 3
    %p192 = por %p190, %p191
    %p193 = scmp.ne.s32.totalorder %s184, %s185
    %p194 = scmp.eq.s32.totalorder %s36, 0
    %p195 = por %p193, %p194
    %p196 = scmp.ne.s32.totalorder %s184, %s185
    %p197 = scmp.eq.s32.totalorder %s37, 3
    %p198 = por %p196, %p197
    %p200 = scmp.ne.s32.totalorder %s185, %s199
    %p201 = scmp.eq.s32.totalorder %s37, 0
    %p202 = por %p200, %p201
    %s204 = sadd.s32 %s203, 1
    %p207 = scmp.eq.s32.totalorder %s31, 3
    %p208 = scmp.ne.s32.totalorder %s203, %s205
    %p209 = scmp.eq.s32.totalorder %s31, 0
    %p210 = por %p208, %p209
    %p211 = scmp.ne.s32.totalorder %s203, %s205
    %p212 = scmp.eq.s32.totalorder %s36, 3
    %p213 = por %p211, %p212
    %p214 = scmp.ne.s32.totalorder %s205, %s206
    %p215 = scmp.eq.s32.totalorder %s36, 0
    %p216 = por %p214, %p215
    %p217 = scmp.ne.s32.totalorder %s205, %s206
    %p218 = scmp.eq.s32.totalorder %s37, 3
    %p219 = por %p217, %p218
    %p221 = scmp.ne.s32.totalorder %s206, %s220
    %p222 = scmp.eq.s32.totalorder %s37, 0
    %p223 = por %p221, %p222
    %s225 = sadd.s32 %s224, 1
    %p228 = scmp.eq.s32.totalorder %s31, 3
    %p229 = scmp.ne.s32.totalorder %s224, %s226
    %p230 = scmp.eq.s32.totalorder %s31, 0
    %p231 = por %p229, %p230
    %p232 = scmp.ne.s32.totalorder %s224, %s226
    %p233 = scmp.eq.s32.totalorder %s36, 3
    %p234 = por %p232, %p233
    %p235 = scmp.ne.s32.totalorder %s226, %s227
    %p236 = scmp.eq.s32.totalorder %s36, 0
    %p237 = por %p235, %p236
    %p238 = scmp.ne.s32.totalorder %s226, %s227
    %p239 = scmp.eq.s32.totalorder %s37, 3
    %p240 = por %p238, %p239
    %p242 = scmp.ne.s32.totalorder %s227, %s241
    %p243 = scmp.eq.s32.totalorder %s37, 0
    %p244 = por %p242, %p243
    %s245 = ssub.s32 %s39, %s46
    %p246 = scmp.eq.s32.totalorder %s245, 0
    %s248 = sadd.s32 %s247, 1
    %s249 = scalar_select %p246, %s247, %s248
    %p252 = pneg %p246
    %p253 = scmp.eq.s32.totalorder %s31, 3
    %p254 = por %p252, %p253
    %p255 = scmp.ne.s32.totalorder %s247, %s250
    %p256 = scmp.eq.s32.totalorder %s31, 0
    %p257 = por %p255, %p256
    %p258 = scmp.ne.s32.totalorder %s247, %s250
    %p259 = scmp.eq.s32.totalorder %s36, 3
    %p260 = por %p258, %p259
    %p261 = scmp.ne.s32.totalorder %s250, %s251
    %p262 = scmp.eq.s32.totalorder %s36, 0
    %p263 = por %p261, %p262
    %p264 = scmp.ne.s32.totalorder %s250, %s251
    %p265 = scmp.eq.s32.totalorder %s37, 3
    %p266 = por %p264, %p265
    %p268 = scmp.ne.s32.totalorder %s251, %s267
    %p269 = scmp.eq.s32.totalorder %s37, 0
    %p270 = por %p268, %p269
    %s271 = ssub.s32 %s39, %s46
    %p272 = scmp.eq.s32.totalorder %s271, 0
    %s274 = sadd.s32 %s273, 1
    %s275 = scalar_select %p272, %s273, %s274
    %p278 = pneg %p272
    %p279 = scmp.eq.s32.totalorder %s31, 3
    %p280 = por %p278, %p279
    %p281 = scmp.ne.s32.totalorder %s273, %s276
    %p282 = scmp.eq.s32.totalorder %s31, 0
    %p283 = por %p281, %p282
    %p284 = scmp.ne.s32.totalorder %s273, %s276
    %p285 = scmp.eq.s32.totalorder %s36, 3
    %p286 = por %p284, %p285
    %p287 = scmp.ne.s32.totalorder %s276, %s277
    %p288 = scmp.eq.s32.totalorder %s36, 0
    %p289 = por %p287, %p288
    %p290 = scmp.ne.s32.totalorder %s276, %s277
    %p291 = scmp.eq.s32.totalorder %s37, 3
    %p292 = por %p290, %p291
    %p294 = scmp.ne.s32.totalorder %s277, %s293
    %p295 = scmp.eq.s32.totalorder %s37, 0
    %p296 = por %p294, %p295
    %s297 = ssub.s32 %s39, %s46
    %p298 = scmp.eq.s32.totalorder %s297, 0
    %s300 = sadd.s32 %s299, 1
    %s301 = scalar_select %p298, %s299, %s300
    %p304 = pneg %p298
    %p305 = scmp.eq.s32.totalorder %s31, 3
    %p306 = por %p304, %p305
    %p307 = scmp.ne.s32.totalorder %s299, %s302
    %p308 = scmp.eq.s32.totalorder %s31, 0
    %p309 = por %p307, %p308
    %p310 = scmp.ne.s32.totalorder %s299, %s302
    %p311 = scmp.eq.s32.totalorder %s36, 3
    %p312 = por %p310, %p311
    %p313 = scmp.ne.s32.totalorder %s302, %s303
    %p314 = scmp.eq.s32.totalorder %s36, 0
    %p315 = por %p313, %p314
    %p316 = scmp.ne.s32.totalorder %s302, %s303
    %p317 = scmp.eq.s32.totalorder %s37, 3
    %p318 = por %p316, %p317
    %p320 = scmp.ne.s32.totalorder %s303, %s319
    %p321 = scmp.eq.s32.totalorder %s37, 0
    %p322 = por %p320, %p321
    %s323 = ssub.s32 %s39, %s46
    %p324 = scmp.eq.s32.totalorder %s323, 0
    %s326 = sadd.s32 %s325, 1
    %s327 = scalar_select %p324, %s325, %s326
    %p330 = pneg %p324
    %p331 = scmp.eq.s32.totalorder %s31, 3
    %p332 = por %p330, %p331
    %p333 = scmp.ne.s32.totalorder %s325, %s328
    %p334 = scmp.eq.s32.totalorder %s31, 0
    %p335 = por %p333, %p334
    %p336 = scmp.ne.s32.totalorder %s325, %s328
    %p337 = scmp.eq.s32.totalorder %s36, 3
    %p338 = por %p336, %p337
    %p339 = scmp.ne.s32.totalorder %s328, %s329
    %p340 = scmp.eq.s32.totalorder %s36, 0
    %p341 = por %p339, %p340
    %p342 = scmp.ne.s32.totalorder %s328, %s329
    %p343 = scmp.eq.s32.totalorder %s37, 3
    %p344 = por %p342, %p343
    %p346 = scmp.ne.s32.totalorder %s329, %s345
    %p347 = scmp.eq.s32.totalorder %s37, 0
    %p348 = por %p346, %p347
    %s349 = ssub.s32 %s39, %s46
    %p350 = scmp.eq.s32.totalorder %s349, 0
    %s352 = sadd.s32 %s351, 1
    %s353 = scalar_select %p350, %s351, %s352
    %p356 = pneg %p350
    %p357 = scmp.eq.s32.totalorder %s31, 3
    %p358 = por %p356, %p357
    %p359 = scmp.ne.s32.totalorder %s351, %s354
    %p360 = scmp.eq.s32.totalorder %s31, 0
    %p361 = por %p359, %p360
    %p362 = scmp.ne.s32.totalorder %s351, %s354
    %p363 = scmp.eq.s32.totalorder %s36, 3
    %p364 = por %p362, %p363
    %p365 = scmp.ne.s32.totalorder %s354, %s355
    %p366 = scmp.eq.s32.totalorder %s36, 0
    %p367 = por %p365, %p366
    %p368 = scmp.ne.s32.totalorder %s354, %s355
    %p369 = scmp.eq.s32.totalorder %s37, 3
    %p370 = por %p368, %p369
    %p372 = scmp.ne.s32.totalorder %s355, %s371
    %p373 = scmp.eq.s32.totalorder %s37, 0
    %p374 = por %p372, %p373
    %s375 = ssub.s32 %s39, %s46
    %p376 = scmp.eq.s32.totalorder %s375, 0
    %s378 = sadd.s32 %s377, 1
    %s379 = scalar_select %p376, %s377, %s378
    %p382 = pneg %p376
    %p383 = scmp.eq.s32.totalorder %s31, 3
    %p384 = por %p382, %p383
    %p385 = scmp.ne.s32.totalorder %s377, %s380
    %p386 = scmp.eq.s32.totalorder %s31, 0
    %p387 = por %p385, %p386
    %p388 = scmp.ne.s32.totalorder %s377, %s380
    %p389 = scmp.eq.s32.totalorder %s36, 3
    %p390 = por %p388, %p389
    %p391 = scmp.ne.s32.totalorder %s380, %s381
    %p392 = scmp.eq.s32.totalorder %s36, 0
    %p393 = por %p391, %p392
    %p394 = scmp.ne.s32.totalorder %s380, %s381
    %p395 = scmp.eq.s32.totalorder %s37, 3
    %p396 = por %p394, %p395
    %p398 = scmp.ne.s32.totalorder %s381, %s397
    %p399 = scmp.eq.s32.totalorder %s37, 0
    %p400 = por %p398, %p399
    %s401 = ssub.s32 %s39, %s46
    %p402 = scmp.eq.s32.totalorder %s401, 0
    %s404 = sadd.s32 %s403, 1
    %s405 = scalar_select %p402, %s403, %s404
    %p408 = pneg %p402
    %p409 = scmp.eq.s32.totalorder %s31, 3
    %p410 = por %p408, %p409
    %p411 = scmp.ne.s32.totalorder %s403, %s406
    %p412 = scmp.eq.s32.totalorder %s31, 0
    %p413 = por %p411, %p412
    %p414 = scmp.ne.s32.totalorder %s403, %s406
    %p415 = scmp.eq.s32.totalorder %s36, 3
    %p416 = por %p414, %p415
    %p417 = scmp.ne.s32.totalorder %s406, %s407
    %p418 = scmp.eq.s32.totalorder %s36, 0
    %p419 = por %p417, %p418
    %p420 = scmp.ne.s32.totalorder %s406, %s407
    %p421 = scmp.eq.s32.totalorder %s37, 3
    %p422 = por %p420, %p421
    %p424 = scmp.ne.s32.totalorder %s407, %s423
    %p425 = scmp.eq.s32.totalorder %s37, 0
    %p426 = por %p424, %p425
    %s427 = ssub.s32 %s39, %s46
    %p428 = scmp.eq.s32.totalorder %s427, 0
    %s430 = sadd.s32 %s429, 1
    %s431 = scalar_select %p428, %s429, %s430
    %p434 = pneg %p428
    %p435 = scmp.eq.s32.totalorder %s31, 3
    %p436 = por %p434, %p435
    %p437 = scmp.ne.s32.totalorder %s429, %s432
    %p438 = scmp.eq.s32.totalorder %s31, 0
    %p439 = por %p437, %p438
    %p440 = scmp.ne.s32.totalorder %s429, %s432
    %p441 = scmp.eq.s32.totalorder %s36, 3
    %p442 = por %p440, %p441
    %p443 = scmp.ne.s32.totalorder %s432, %s433
    %p444 = scmp.eq.s32.totalorder %s36, 0
    %p445 = por %p443, %p444
    %p446 = scmp.ne.s32.totalorder %s432, %s433
    %p447 = scmp.eq.s32.totalorder %s37, 3
    %p448 = por %p446, %p447
    %p450 = scmp.ne.s32.totalorder %s433, %s449
    %p451 = scmp.eq.s32.totalorder %s37, 0
    %p452 = por %p450, %p451
    %s453 = ssub.s32 %s39, %s46
    %p454 = scmp.eq.s32.totalorder %s453, 0
    %s456 = sadd.s32 %s455, 1
    %s457 = scalar_select %p454, %s455, %s456
    %p460 = pneg %p454
    %p461 = scmp.eq.s32.totalorder %s31, 3
    %p462 = por %p460, %p461
    %p463 = scmp.ne.s32.totalorder %s455, %s458
    %p464 = scmp.eq.s32.totalorder %s31, 0
    %p465 = por %p463, %p464
    %p466 = scmp.ne.s32.totalorder %s455, %s458
    %p467 = scmp.eq.s32.totalorder %s36, 3
    %p468 = por %p466, %p467
    %p469 = scmp.ne.s32.totalorder %s458, %s459
    %p470 = scmp.eq.s32.totalorder %s36, 0
    %p471 = por %p469, %p470
    %p472 = scmp.ne.s32.totalorder %s458, %s459
    %p473 = scmp.eq.s32.totalorder %s37, 3
    %p474 = por %p472, %p473
    %p476 = scmp.ne.s32.totalorder %s459, %s475
    %p477 = scmp.eq.s32.totalorder %s37, 0
    %p478 = por %p476, %p477
    %s479 = ssub.s32 %s39, %s46
    %p480 = scmp.eq.s32.totalorder %s479, 0
    %s482 = sadd.s32 %s481, 1
    %s483 = scalar_select %p480, %s481, %s482
    %p486 = pneg %p480
    %p487 = scmp.eq.s32.totalorder %s31, 3
    %p488 = por %p486, %p487
    %p489 = scmp.ne.s32.totalorder %s481, %s484
    %p490 = scmp.eq.s32.totalorder %s31, 0
    %p491 = por %p489, %p490
    %p492 = scmp.ne.s32.totalorder %s481, %s484
    %p493 = scmp.eq.s32.totalorder %s36, 3
    %p494 = por %p492, %p493
    %p495 = scmp.ne.s32.totalorder %s484, %s485
    %p496 = scmp.eq.s32.totalorder %s36, 0
    %p497 = por %p495, %p496
    %p498 = scmp.ne.s32.totalorder %s484, %s485
    %p499 = scmp.eq.s32.totalorder %s37, 3
    %p500 = por %p498, %p499
    %p502 = scmp.ne.s32.totalorder %s485, %s501
    %p503 = scmp.eq.s32.totalorder %s37, 0
    %p504 = por %p502, %p503
    %s505 = ssub.s32 %s39, %s46
    %p506 = scmp.eq.s32.totalorder %s505, 0
    %s508 = sadd.s32 %s507, 1
    %s509 = scalar_select %p506, %s507, %s508
    %p512 = pneg %p506
    %p513 = scmp.eq.s32.totalorder %s31, 3
    %p514 = por %p512, %p513
    %p515 = scmp.ne.s32.totalorder %s507, %s510
    %p516 = scmp.eq.s32.totalorder %s31, 0
    %p517 = por %p515, %p516
    %p518 = scmp.ne.s32.totalorder %s507, %s510
    %p519 = scmp.eq.s32.totalorder %s36, 3
    %p520 = por %p518, %p519
    %p521 = scmp.ne.s32.totalorder %s510, %s511
    %p522 = scmp.eq.s32.totalorder %s36, 0
    %p523 = por %p521, %p522
    %p524 = scmp.ne.s32.totalorder %s510, %s511
    %p525 = scmp.eq.s32.totalorder %s37, 3
    %p526 = por %p524, %p525
    %p528 = scmp.ne.s32.totalorder %s511, %s527
    %p529 = scmp.eq.s32.totalorder %s37, 0
    %p530 = por %p528, %p529
    %s531 = ssub.s32 %s39, %s46
    %p532 = scmp.eq.s32.totalorder %s531, 0
    %s534 = sadd.s32 %s533, 1
    %s535 = scalar_select %p532, %s533, %s534
    %p538 = pneg %p532
    %p539 = scmp.eq.s32.totalorder %s31, 3
    %p540 = por %p538, %p539
    %p541 = scmp.ne.s32.totalorder %s533, %s536
    %p542 = scmp.eq.s32.totalorder %s31, 0
    %p543 = por %p541, %p542
    %p544 = scmp.ne.s32.totalorder %s533, %s536
    %p545 = scmp.eq.s32.totalorder %s36, 3
    %p546 = por %p544, %p545
    %p547 = scmp.ne.s32.totalorder %s536, %s537
    %p548 = scmp.eq.s32.totalorder %s36, 0
    %p549 = por %p547, %p548
    %p550 = scmp.ne.s32.totalorder %s536, %s537
    %p551 = scmp.eq.s32.totalorder %s37, 3
    %p552 = por %p550, %p551
    %p554 = scmp.ne.s32.totalorder %s537, %s553
    %p555 = scmp.eq.s32.totalorder %s37, 0
    %p556 = por %p554, %p555
    %s558 = sadd.s32 %s557, 1
    %p561 = scmp.eq.s32.totalorder %s31, 3
    %p562 = scmp.ne.s32.totalorder %s557, %s559
    %p563 = scmp.eq.s32.totalorder %s31, 0
    %p564 = por %p562, %p563
    %p565 = scmp.ne.s32.totalorder %s557, %s559
    %p566 = scmp.eq.s32.totalorder %s36, 3
    %p567 = por %p565, %p566
    %p568 = scmp.ne.s32.totalorder %s559, %s560
    %p569 = scmp.eq.s32.totalorder %s36, 0
    %p570 = por %p568, %p569
    %p571 = scmp.ne.s32.totalorder %s559, %s560
    %p572 = scmp.eq.s32.totalorder %s37, 3
    %p573 = por %p571, %p572
    %p575 = scmp.ne.s32.totalorder %s560, %s574
    %p576 = scmp.eq.s32.totalorder %s37, 0
    %p577 = por %p575, %p576
    %s579 = sadd.s32 %s578, 1
    %p582 = scmp.eq.s32.totalorder %s31, 3
    %p583 = scmp.ne.s32.totalorder %s578, %s580
    %p584 = scmp.eq.s32.totalorder %s31, 0
    %p585 = por %p583, %p584
    %p586 = scmp.ne.s32.totalorder %s578, %s580
    %p587 = scmp.eq.s32.totalorder %s36, 3
    %p588 = por %p586, %p587
    %p589 = scmp.ne.s32.totalorder %s580, %s581
    %p590 = scmp.eq.s32.totalorder %s36, 0
    %p591 = por %p589, %p590
    %p592 = scmp.ne.s32.totalorder %s580, %s581
    %p593 = scmp.eq.s32.totalorder %s37, 3
    %p594 = por %p592, %p593
    %p596 = scmp.ne.s32.totalorder %s581, %s595
    %p597 = scmp.eq.s32.totalorder %s37, 0
    %p598 = por %p596, %p597
    %s600 = sadd.s32 %s599, 1
    %p603 = scmp.eq.s32.totalorder %s31, 3
    %p604 = scmp.ne.s32.totalorder %s599, %s601
    %p605 = scmp.eq.s32.totalorder %s31, 0
    %p606 = por %p604, %p605
    %p607 = scmp.ne.s32.totalorder %s599, %s601
    %p608 = scmp.eq.s32.totalorder %s36, 3
    %p609 = por %p607, %p608
    %p610 = scmp.ne.s32.totalorder %s601, %s602
    %p611 = scmp.eq.s32.totalorder %s36, 0
    %p612 = por %p610, %p611
    %p613 = scmp.ne.s32.totalorder %s601, %s602
    %p614 = scmp.eq.s32.totalorder %s37, 3
    %p615 = por %p613, %p614
    %p617 = scmp.ne.s32.totalorder %s602, %s616
    %p618 = scmp.eq.s32.totalorder %s37, 0
    %p619 = por %p617, %p618
    %s621 = sadd.s32 %s620, 1
    %p624 = scmp.eq.s32.totalorder %s31, 3
    %p625 = scmp.ne.s32.totalorder %s620, %s622
    %p626 = scmp.eq.s32.totalorder %s31, 0
    %p627 = por %p625, %p626
    %p628 = scmp.ne.s32.totalorder %s620, %s622
    %p629 = scmp.eq.s32.totalorder %s36, 3
    %p630 = por %p628, %p629
    %p631 = scmp.ne.s32.totalorder %s622, %s623
    %p632 = scmp.eq.s32.totalorder %s36, 0
    %p633 = por %p631, %p632
    %p634 = scmp.ne.s32.totalorder %s622, %s623
    %p635 = scmp.eq.s32.totalorder %s37, 3
    %p636 = por %p634, %p635
    %p638 = scmp.ne.s32.totalorder %s623, %s637
    %p639 = scmp.eq.s32.totalorder %s37, 0
    %p640 = por %p638, %p639
    %s641 = ssub.s32 %s38, %s50
    %p642 = scmp.eq.s32.totalorder %s641, 0
    %s644 = sadd.s32 %s643, 1
    %s645 = scalar_select %p642, %s643, %s644
    %p648 = pneg %p642
    %p649 = scmp.eq.s32.totalorder %s31, 3
    %p650 = por %p648, %p649
    %p651 = scmp.ne.s32.totalorder %s643, %s646
    %p652 = scmp.eq.s32.totalorder %s31, 0
    %p653 = por %p651, %p652
    %p654 = scmp.ne.s32.totalorder %s643, %s646
    %p655 = scmp.eq.s32.totalorder %s36, 3
    %p656 = por %p654, %p655
    %p657 = scmp.ne.s32.totalorder %s646, %s647
    %p658 = scmp.eq.s32.totalorder %s36, 0
    %p659 = por %p657, %p658
    %p660 = scmp.ne.s32.totalorder %s646, %s647
    %p661 = scmp.eq.s32.totalorder %s37, 3
    %p662 = por %p660, %p661
    %p664 = scmp.ne.s32.totalorder %s647, %s663
    %p665 = scmp.eq.s32.totalorder %s37, 0
    %p666 = por %p664, %p665
    %p667 = scmp.le.s32.totalorder 1, %s31
    %p668 = scmp.lt.s32.totalorder %s31, 5
    %p669 = pnand %p667, %p668
    %p670 = pneg %p669
    // Predicated region
    $region9: #{tpu_custom_call.1} parent=5 // pred_check
      _
    $region10: #{tpu_custom_call.1} parent=5 // pred_check_branch
      %672 = sbr.rel (%p669) target = $region12
    $region11: #{tpu_custom_call.1} parent=5 // pred_region
      %s673 = ssub.s32 %s31, 1
      // Predicated region
      $region13: #{tpu_custom_call.1} parent=11 // pred_check
        %p674 = pneg %p90
      $region14: #{tpu_custom_call.1} parent=11 // pred_check_branch
        %676 = sbr.rel (%p674) target = $region16
      $region15: #{tpu_custom_call.1} parent=11 // pred_region
        _
      $region16: #{tpu_custom_call.1} parent=11 // pred_fallthru
        _
      // Predicated region
      $region17: #{tpu_custom_call.1} parent=11 // pred_check
        %p677 = pneg %p111
      $region18: #{tpu_custom_call.1} parent=11 // pred_check_branch
        %679 = sbr.rel (%p677) target = $region20
      $region19: #{tpu_custom_call.1} parent=11 // pred_region
        _
      $region20: #{tpu_custom_call.1} parent=11 // pred_fallthru
        _
      // Predicated region
      $region21: #{tpu_custom_call.1} parent=11 // pred_check
        %p680 = pneg %p132
      $region22: #{tpu_custom_call.1} parent=11 // pred_check_branch
        %682 = sbr.rel (%p680) target = $region24
      $region23: #{tpu_custom_call.1} parent=11 // pred_region
        _
      $region24: #{tpu_custom_call.1} parent=11 // pred_fallthru
        _
      // Predicated region
      $region25: #{tpu_custom_call.1} parent=11 // pred_check
        %p683 = pneg %p153
      $region26: #{tpu_custom_call.1} parent=11 // pred_check_branch
        %685 = sbr.rel (%p683) target = $region28
      $region27: #{tpu_custom_call.1} parent=11 // pred_region
        _
      $region28: #{tpu_custom_call.1} parent=11 // pred_fallthru
        _
      // Predicated region
      $region29: #{tpu_custom_call.1} parent=11 // pred_check
        %p686 = pneg %p174
      $region30: #{tpu_custom_call.1} parent=11 // pred_check_branch
        %688 = sbr.rel (%p686) target = $region32
      $region31: #{tpu_custom_call.1} parent=11 // pred_region
        _
      $region32: #{tpu_custom_call.1} parent=11 // pred_fallthru
        _
      // Predicated region
      $region33: #{tpu_custom_call.1} parent=11 // pred_check
        %p689 = pneg %p195
      $region34: #{tpu_custom_call.1} parent=11 // pred_check_branch
        %691 = sbr.rel (%p689) target = $region36
      $region35: #{tpu_custom_call.1} parent=11 // pred_region
        _
      $region36: #{tpu_custom_call.1} parent=11 // pred_fallthru
        _
      // Predicated region
      $region37: #{tpu_custom_call.1} parent=11 // pred_check
        %p692 = pneg %p216
      $region38: #{tpu_custom_call.1} parent=11 // pred_check_branch
        %694 = sbr.rel (%p692) target = $region40
      $region39: #{tpu_custom_call.1} parent=11 // pred_region
        _
      $region40: #{tpu_custom_call.1} parent=11 // pred_fallthru
        _
      // Predicated region
      $region41: #{tpu_custom_call.1} parent=11 // pred_check
        %p695 = pneg %p237
      $region42: #{tpu_custom_call.1} parent=11 // pred_check_branch
        %697 = sbr.rel (%p695) target = $region44
      $region43: #{tpu_custom_call.1} parent=11 // pred_region
        _
      $region44: #{tpu_custom_call.1} parent=11 // pred_fallthru
        _
      // Predicated region
      $region45: #{tpu_custom_call.1} parent=11 // pred_check
        %p698 = pneg %p570
      $region46: #{tpu_custom_call.1} parent=11 // pred_check_branch
        %700 = sbr.rel (%p698) target = $region48
      $region47: #{tpu_custom_call.1} parent=11 // pred_region
        _
      $region48: #{tpu_custom_call.1} parent=11 // pred_fallthru
        _
      // Predicated region
      $region49: #{tpu_custom_call.1} parent=11 // pred_check
        %p701 = pneg %p591
      $region50: #{tpu_custom_call.1} parent=11 // pred_check_branch
        %703 = sbr.rel (%p701) target = $region52
      $region51: #{tpu_custom_call.1} parent=11 // pred_region
        _
      $region52: #{tpu_custom_call.1} parent=11 // pred_fallthru
        _
      // Predicated region
      $region53: #{tpu_custom_call.1} parent=11 // pred_check
        %p704 = pneg %p612
      $region54: #{tpu_custom_call.1} parent=11 // pred_check_branch
        %706 = sbr.rel (%p704) target = $region56
      $region55: #{tpu_custom_call.1} parent=11 // pred_region
        _
      $region56: #{tpu_custom_call.1} parent=11 // pred_fallthru
        _
      // Predicated region
      $region57: #{tpu_custom_call.1} parent=11 // pred_check
        %p707 = pneg %p633
      $region58: #{tpu_custom_call.1} parent=11 // pred_check_branch
        %709 = sbr.rel (%p707) target = $region60
      $region59: #{tpu_custom_call.1} parent=11 // pred_region
        _
      $region60: #{tpu_custom_call.1} parent=11 // pred_fallthru
        _
    $region12: #{tpu_custom_call.1} parent=5 // pred_fallthru
      _
    %p710 = scmp.lt.s32.totalorder %s31, 4
    // Predicated region
    $region61: #{tpu_custom_call.1} parent=5 // pred_check
      %p711 = pneg %p710
    $region62: #{tpu_custom_call.1} parent=5 // pred_check_branch
      %713 = sbr.rel (%p711) target = $region64
    $region63: #{tpu_custom_call.1} parent=5 // pred_region
      // Predicated region
      $region65: #{tpu_custom_call.1} parent=63 // pred_check
        %p714 = pneg %p63
      $region66: #{tpu_custom_call.1} parent=63 // pred_check_branch
        %716 = sbr.rel (%p714) target = $region68
      $region67: #{tpu_custom_call.1} parent=63 // pred_region
        %p717 = scmp.lt.s32.totalorder %s38, 1
        %s718 = scalar_select %p717, %s38, 1
        %s719 = smul.addr %s718, 8
        %s720 = scalar_lea.vmem %s0, %s719
      $region68: #{tpu_custom_call.1} parent=63 // pred_fallthru
        _
      // Predicated region
      $region69: #{tpu_custom_call.1} parent=63 // pred_check
        %p721 = pneg %p257
      $region70: #{tpu_custom_call.1} parent=63 // pred_check_branch
        %723 = sbr.rel (%p721) target = $region72
      $region71: #{tpu_custom_call.1} parent=63 // pred_region
        %p724 = scmp.lt.s32.totalorder %s39, 1
        %s725 = scalar_select %p724, %s39, 1
        %s726 = smul.addr %s725, 4
        %s727 = smul.addr %s726, 4
        %s728 = scalar_lea.vmem %s9, %s727
      $region72: #{tpu_custom_call.1} parent=63 // pred_fallthru
        _
      // Predicated region
      $region73: #{tpu_custom_call.1} parent=63 // pred_check
        %p729 = pneg %p283
      $region74: #{tpu_custom_call.1} parent=63 // pred_check_branch
        %731 = sbr.rel (%p729) target = $region76
      $region75: #{tpu_custom_call.1} parent=63 // pred_region
        %p732 = scmp.lt.s32.totalorder %s39, 1
        %s733 = scalar_select %p732, %s39, 1
        %s734 = scalar_lea.vmem %s10, %s733
      $region76: #{tpu_custom_call.1} parent=63 // pred_fallthru
        _
      // Predicated region
      $region77: #{tpu_custom_call.1} parent=63 // pred_check
        %p735 = pneg %p309
      $region78: #{tpu_custom_call.1} parent=63 // pred_check_branch
        %737 = sbr.rel (%p735) target = $region80
      $region79: #{tpu_custom_call.1} parent=63 // pred_region
        %p738 = scmp.lt.s32.totalorder %s39, 1
        %s739 = scalar_select %p738, %s39, 1
        %s740 = smul.addr %s739, 4
        %s741 = smul.addr %s740, 4
        %s742 = scalar_lea.vmem %s11, %s741
      $region80: #{tpu_custom_call.1} parent=63 // pred_fallthru
        _
      // Predicated region
      $region81: #{tpu_custom_call.1} parent=63 // pred_check
        %p743 = pneg %p335
      $region82: #{tpu_custom_call.1} parent=63 // pred_check_branch
        %745 = sbr.rel (%p743) target = $region84
      $region83: #{tpu_custom_call.1} parent=63 // pred_region
        %p746 = scmp.lt.s32.totalorder %s39, 1
        %s747 = scalar_select %p746, %s39, 1
        %s748 = scalar_lea.vmem %s12, %s747
      $region84: #{tpu_custom_call.1} parent=63 // pred_fallthru
        _
      // Predicated region
      $region85: #{tpu_custom_call.1} parent=63 // pred_check
        %p749 = pneg %p361
      $region86: #{tpu_custom_call.1} parent=63 // pred_check_branch
        %751 = sbr.rel (%p749) target = $region88
      $region87: #{tpu_custom_call.1} parent=63 // pred_region
        %p752 = scmp.lt.s32.totalorder %s39, 1
        %s753 = scalar_select %p752, %s39, 1
        %s754 = scalar_lea.vmem %s13, %s753
      $region88: #{tpu_custom_call.1} parent=63 // pred_fallthru
        _
      // Predicated region
      $region89: #{tpu_custom_call.1} parent=63 // pred_check
        %p755 = pneg %p387
      $region90: #{tpu_custom_call.1} parent=63 // pred_check_branch
        %757 = sbr.rel (%p755) target = $region92
      $region91: #{tpu_custom_call.1} parent=63 // pred_region
        %p758 = scmp.lt.s32.totalorder %s39, 1
        %s759 = scalar_select %p758, %s39, 1
        %s760 = scalar_lea.vmem %s14, %s759
      $region92: #{tpu_custom_call.1} parent=63 // pred_fallthru
        _
      // Predicated region
      $region93: #{tpu_custom_call.1} parent=63 // pred_check
        %p761 = pneg %p413
      $region94: #{tpu_custom_call.1} parent=63 // pred_check_branch
        %763 = sbr.rel (%p761) target = $region96
      $region95: #{tpu_custom_call.1} parent=63 // pred_region
        %p764 = scmp.lt.s32.totalorder %s39, 1
        %s765 = scalar_select %p764, %s39, 1
        %s766 = smul.addr %s765, 4
        %s767 = smul.addr %s766, 4
        %s768 = scalar_lea.vmem %s15, %s767
      $region96: #{tpu_custom_call.1} parent=63 // pred_fallthru
        _
      // Predicated region
      $region97: #{tpu_custom_call.1} parent=63 // pred_check
        %p769 = pneg %p439
      $region98: #{tpu_custom_call.1} parent=63 // pred_check_branch
        %771 = sbr.rel (%p769) target = $region100
      $region99: #{tpu_custom_call.1} parent=63 // pred_region
        %p772 = scmp.lt.s32.totalorder %s39, 1
        %s773 = scalar_select %p772, %s39, 1
        %s774 = scalar_lea.vmem %s16, %s773
      $region100: #{tpu_custom_call.1} parent=63 // pred_fallthru
        _
      // Predicated region
      $region101: #{tpu_custom_call.1} parent=63 // pred_check
        %p775 = pneg %p465
      $region102: #{tpu_custom_call.1} parent=63 // pred_check_branch
        %777 = sbr.rel (%p775) target = $region104
      $region103: #{tpu_custom_call.1} parent=63 // pred_region
        %p778 = scmp.lt.s32.totalorder %s39, 1
        %s779 = scalar_select %p778, %s39, 1
        %s780 = smul.addr %s779, 16
        %s781 = smul.addr %s780, 4
        %s782 = scalar_lea.vmem %s17, %s781
      $region104: #{tpu_custom_call.1} parent=63 // pred_fallthru
        _
      // Predicated region
      $region105: #{tpu_custom_call.1} parent=63 // pred_check
        %p783 = pneg %p491
      $region106: #{tpu_custom_call.1} parent=63 // pred_check_branch
        %785 = sbr.rel (%p783) target = $region108
      $region107: #{tpu_custom_call.1} parent=63 // pred_region
        %p786 = scmp.lt.s32.totalorder %s39, 1
        %s787 = scalar_select %p786, %s39, 1
        %s788 = scalar_lea.vmem %s18, %s787
      $region108: #{tpu_custom_call.1} parent=63 // pred_fallthru
        _
      // Predicated region
      $region109: #{tpu_custom_call.1} parent=63 // pred_check
        %p789 = pneg %p517
      $region110: #{tpu_custom_call.1} parent=63 // pred_check_branch
        %791 = sbr.rel (%p789) target = $region112
      $region111: #{tpu_custom_call.1} parent=63 // pred_region
        %p792 = scmp.lt.s32.totalorder %s39, 1
        %s793 = scalar_select %p792, %s39, 1
        %s794 = scalar_lea.vmem %s19, %s793
      $region112: #{tpu_custom_call.1} parent=63 // pred_fallthru
        _
      // Predicated region
      $region113: #{tpu_custom_call.1} parent=63 // pred_check
        %p795 = pneg %p543
      $region114: #{tpu_custom_call.1} parent=63 // pred_check_branch
        %797 = sbr.rel (%p795) target = $region116
      $region115: #{tpu_custom_call.1} parent=63 // pred_region
        %p798 = scmp.lt.s32.totalorder %s39, 1
        %s799 = scalar_select %p798, %s39, 1
        %s800 = scalar_lea.vmem %s20, %s799
      $region116: #{tpu_custom_call.1} parent=63 // pred_fallthru
        _
    $region64: #{tpu_custom_call.1} parent=5 // pred_fallthru
      _
    %p801 = scmp.le.s32.totalorder 1, %s31
    %p802 = scmp.lt.s32.totalorder %s31, 5
    %p803 = pnand %p801, %p802
    %p804 = pneg %p803
    // Predicated region
    $region117: #{tpu_custom_call.1} parent=5 // pred_check
      _
    $region118: #{tpu_custom_call.1} parent=5 // pred_check_branch
      %806 = sbr.rel (%p803) target = $region120
    $region119: #{tpu_custom_call.1} parent=5 // pred_region
      %s807 = ssub.s32 %s31, 1
      %p808 = scmp.lt.s32.totalorder %s40, 1
      %s809 = scalar_select %p808, %s40, 1
      %s810 = smul.addr %s809, 8
      %s811 = scalar_lea.vmem %s0, %s810
      %p812 = pneg %p69
      %p813 = pneg %p66
      %p814 = pneg %p90
      %p815 = pneg %p87
      %p816 = pneg %p111
      %p817 = pneg %p108
      %p818 = pneg %p132
      %p819 = pneg %p129
      %p820 = pneg %p153
      %p821 = pneg %p150
      %p822 = pneg %p174
      %p823 = pneg %p171
      %p824 = pneg %p195
      %p825 = pneg %p192
      %p826 = pneg %p216
      %p827 = pneg %p213
      %p828 = pneg %p237
      %p829 = pneg %p234
      %p830 = scmp.lt.s32.totalorder %s41, 1
      %s831 = scalar_select %p830, %s41, 1
      %s832 = smul.addr %s831, 4
      %s833 = smul.addr %s832, 4
      %s834 = scalar_lea.vmem %s9, %s833
      %p835 = pneg %p263
      %p836 = pneg %p260
      %p837 = scmp.lt.s32.totalorder %s41, 1
      %s838 = scalar_select %p837, %s41, 1
      %s839 = scalar_lea.vmem %s10, %s838
      %p840 = pneg %p289
      %p841 = pneg %p286
      %p842 = scmp.lt.s32.totalorder %s41, 1
      %s843 = scalar_select %p842, %s41, 1
      %s844 = smul.addr %s843, 4
      %s845 = smul.addr %s844, 4
      %s846 = scalar_lea.vmem %s11, %s845
      %p847 = pneg %p315
      %p848 = pneg %p312
      %p849 = scmp.lt.s32.totalorder %s41, 1
      %s850 = scalar_select %p849, %s41, 1
      %s851 = scalar_lea.vmem %s12, %s850
      %p852 = pneg %p341
      %p853 = pneg %p338
      %p854 = scmp.lt.s32.totalorder %s41, 1
      %s855 = scalar_select %p854, %s41, 1
      %s856 = scalar_lea.vmem %s13, %s855
      %p857 = pneg %p367
      %p858 = pneg %p364
      %p859 = scmp.lt.s32.totalorder %s41, 1
      %s860 = scalar_select %p859, %s41, 1
      %s861 = scalar_lea.vmem %s14, %s860
      %p862 = pneg %p393
      %p863 = pneg %p390
      %p864 = scmp.lt.s32.totalorder %s41, 1
      %s865 = scalar_select %p864, %s41, 1
      %s866 = smul.addr %s865, 4
      %s867 = smul.addr %s866, 4
      %s868 = scalar_lea.vmem %s15, %s867
      %p869 = pneg %p419
      %p870 = pneg %p416
      %p871 = scmp.lt.s32.totalorder %s41, 1
      %s872 = scalar_select %p871, %s41, 1
      %s873 = scalar_lea.vmem %s16, %s872
      %p874 = pneg %p445
      %p875 = pneg %p442
      %p876 = scmp.lt.s32.totalorder %s41, 1
      %s877 = scalar_select %p876, %s41, 1
      %s878 = smul.addr %s877, 16
      %s879 = smul.addr %s878, 4
      %s880 = scalar_lea.vmem %s17, %s879
      %p881 = pneg %p471
      %p882 = pneg %p468
      %p883 = scmp.lt.s32.totalorder %s41, 1
      %s884 = scalar_select %p883, %s41, 1
      %s885 = scalar_lea.vmem %s18, %s884
      %p886 = pneg %p497
      %p887 = pneg %p494
      %p888 = scmp.lt.s32.totalorder %s41, 1
      %s889 = scalar_select %p888, %s41, 1
      %s890 = scalar_lea.vmem %s19, %s889
      %p891 = pneg %p523
      %p892 = pneg %p520
      %p893 = scmp.lt.s32.totalorder %s41, 1
      %s894 = scalar_select %p893, %s41, 1
      %s895 = scalar_lea.vmem %s20, %s894
      %p896 = pneg %p549
      %p897 = pneg %p546
      %p898 = pneg %p570
      %p899 = pneg %p567
      %p900 = pneg %p591
      %p901 = pneg %p588
      %p902 = pneg %p612
      %p903 = pneg %p609
      %p904 = pneg %p633
      %p905 = pneg %p630
      %p906 = pneg %p659
      %p907 = pneg %p656
      %p908 = scmp.lt.s32.totalorder %s40, 1
      %s909 = scalar_select %p908, %s40, 1
      %s910 = smul.addr %s909, 8
      %s911 = scalar_lea.vmem %s25, %s910
      %p912 = scmp.lt.s32.totalorder %s40, 1
      %s913 = scalar_select %p912, %s40, 1
      %s914 = smul.addr %s913, 8
      %s915 = scalar_lea.vmem %s0, %s914
      %p916 = scmp.lt.s32.totalorder %s41, 1
      %s917 = scalar_select %p916, %s41, 1
      %s918 = smul.addr %s917, 4
      %s919 = smul.addr %s918, 4
      %s920 = scalar_lea.vmem %s9, %s919
      %p921 = scmp.lt.s32.totalorder %s41, 1
      %s922 = scalar_select %p921, %s41, 1
      %s923 = scalar_lea.vmem %s10, %s922
      %p924 = scmp.lt.s32.totalorder %s41, 1
      %s925 = scalar_select %p924, %s41, 1
      %s926 = smul.addr %s925, 4
      %s927 = smul.addr %s926, 4
      %s928 = scalar_lea.vmem %s11, %s927
      %p929 = scmp.lt.s32.totalorder %s41, 1
      %s930 = scalar_select %p929, %s41, 1
      %s931 = scalar_lea.vmem %s12, %s930
      %p932 = scmp.lt.s32.totalorder %s41, 1
      %s933 = scalar_select %p932, %s41, 1
      %s934 = scalar_lea.vmem %s13, %s933
      %p935 = scmp.lt.s32.totalorder %s41, 1
      %s936 = scalar_select %p935, %s41, 1
      %s937 = scalar_lea.vmem %s14, %s936
      %p938 = scmp.lt.s32.totalorder %s41, 1
      %s939 = scalar_select %p938, %s41, 1
      %s940 = smul.addr %s939, 4
      %s941 = smul.addr %s940, 4
      %s942 = scalar_lea.vmem %s15, %s941
      %p943 = scmp.lt.s32.totalorder %s41, 1
      %s944 = scalar_select %p943, %s41, 1
      %s945 = scalar_lea.vmem %s16, %s944
      %p946 = scmp.lt.s32.totalorder %s41, 1
      %s947 = scalar_select %p946, %s41, 1
      %s948 = smul.addr %s947, 16
      %s949 = smul.addr %s948, 4
      %s950 = scalar_lea.vmem %s17, %s949
      %p951 = scmp.lt.s32.totalorder %s41, 1
      %s952 = scalar_select %p951, %s41, 1
      %s953 = scalar_lea.vmem %s18, %s952
      %p954 = scmp.lt.s32.totalorder %s41, 1
      %s955 = scalar_select %p954, %s41, 1
      %s956 = scalar_lea.vmem %s19, %s955
      %p957 = scmp.lt.s32.totalorder %s41, 1
      %s958 = scalar_select %p957, %s41, 1
      %s959 = scalar_lea.vmem %s20, %s958
      %p960 = scmp.lt.s32.totalorder %s40, 1
      %s961 = scalar_select %p960, %s40, 1
      %s962 = smul.addr %s961, 8
      %s963 = scalar_lea.vmem %s25, %s962
      %p965 = scmp.eq.s32.totalorder %s41, 0
      // Predicated region
      $region121: #{tpu_custom_call.1} parent=119 // pred_check
        %p966 = pneg %p965
      $region122: #{tpu_custom_call.1} parent=119 // pred_check_branch
        %968 = sbr.rel (%p966) target = $region124
      $region123: #{tpu_custom_call.1} parent=119 // pred_region
        %v969 = vld [vmem:[%s915] sm:$0xff]
        %v970 = vld [vmem:[%s3] sm:$0x7]
        %v971 = vpack.c.bf16 %v969, %v969
        %v972 = vld [vmem:[%s4] sm:$0x1]
        %v974 = vlaneseq
        %v975 = vshrl.u32 %v974, 7
        %v976 = vsub.s32 0, %v975
        %v977 = vrot.slane %v972, %v976
        %vm979 = vcmask 48128
        %v981 = vsel %vm979, %v971, 0
        %vm983 = vcmask 1042432
        %v985 = vsel %vm983, %v970, 0
        %987 = vmatprep.subr.bf16.mxu0 0
        %988 = vmatpush1.bf16.msra.mxu0 %v985
        %989 = vmatprep.subr.bf16.mxu0 0
        %990 = vmatpush1.bf16.msra.mxu0 0
        %991 = vmatprep.subr.bf16.mxu0 0
        %992 = vmatpush1.bf16.msra.mxu0 0
        %993 = vmatprep.subr.bf16.mxu0 0
        %994 = vmatpush1.bf16.msra.mxu0 0
        %995 = vmatprep.subr.bf16.mxu0 0
        %996 = vmatpush1.bf16.msra.mxu0 0
        %997 = vmatprep.subr.bf16.mxu0 0
        %998 = vmatpush1.bf16.msra.mxu0 0
        %999 = vmatprep.subr.bf16.mxu0 0
        %1000 = vmatpush1.bf16.msra.mxu0 0
        %1001 = vmatprep.subr.bf16.mxu0 0
        %1002 = vmatpush1.bf16.msra.mxu0 0
        %1003 = vmatprep.subr.bf16.mxu0 0
        %1004 = vmatpush1.bf16.msra.mxu0 0
        %1005 = vmatprep.subr.bf16.mxu0 0
        %1006 = vmatpush1.bf16.msra.mxu0 0
        %1007 = vmatprep.subr.bf16.mxu0 0
        %1008 = vmatpush1.bf16.msra.mxu0 0
        %1009 = vmatprep.subr.bf16.mxu0 0
        %1010 = vmatpush1.bf16.msra.mxu0 0
        %1011 = vmatprep.subr.bf16.mxu0 0
        %1012 = vmatpush1.bf16.msra.mxu0 0
        %1013 = vmatprep.subr.bf16.mxu0 0
        %1014 = vmatpush1.bf16.msra.mxu0 0
        %1015 = vmatprep.subr.bf16.mxu0 0
        %1016 = vmatpush1.bf16.msra.mxu0 0
        %1017 = vmatprep.subr.bf16.mxu0 0
        %1018 = vmatpush1.bf16.msra.mxu0 0
        %1019 = vmatprep.mubr.bf16.mxu0 0
        %1020 = vmatmul.mubr.bf16.gmra.mrb[0].mxu0 %v981
        %v1021 = vpop.f32.mrb[0].mxu0
        %v1022 = vadd.f32 %v977, %v1021
        %v1023 = vpop.f32.mrb[0].mxu0
        %v1024 = vpop.f32.mrb[0].mxu0
        %v1025 = vpop.f32.mrb[0].mxu0
        %1026 = vdwg.mxu0
        %v1027 = vmax.f32 %v1022, 0.0
        %v1028 = vld [vmem:[%s5] sm:$0xf]
        %v1029 = vld [vmem:[%s5 + $0x4] sm:$0xf]
        %v1030 = vld [vmem:[%s5 + $0x8] sm:$0xf]
        %v1031 = vld [vmem:[%s5 + $0xc] sm:$0xf]
        %v1032 = vld [vmem:[%s5 + $0x10] sm:$0xf]
        %v1033 = vld [vmem:[%s5 + $0x14] sm:$0xf]
        %v1034 = vld [vmem:[%s5 + $0x18] sm:$0xf]
        %v1035 = vld [vmem:[%s5 + $0x1c] sm:$0xf]
        %v1036 = vld [vmem:[%s5 + $0x20] sm:$0xf]
        %v1037 = vld [vmem:[%s5 + $0x24] sm:$0xf]
        %v1038 = vld [vmem:[%s5 + $0x28] sm:$0xf]
        %v1039 = vld [vmem:[%s5 + $0x2c] sm:$0xf]
        %v1040 = vpack.c.bf16 %v1027, %v1027
        %v1041 = vld [vmem:[%s6] sm:$0x1]
        %v1043 = vlaneseq
        %v1044 = vshrl.u32 %v1043, 7
        %v1045 = vsub.s32 0, %v1044
        %v1046 = vrot.slane %v1041, %v1045
        %v1060 = vunpack.c.l.b16 %v1028
        %v1061 = vunpack.c.l.b16 %v1029
        %v1062 = vunpack.c.l.b16 %v1030
        %v1063 = vunpack.c.l.b16 %v1031
        %v1064 = vunpack.c.l.b16 %v1032
        %v1065 = vunpack.c.l.b16 %v1033
        %v1066 = vunpack.c.l.b16 %v1034
        %v1067 = vunpack.c.l.b16 %v1035
        %v1068 = vunpack.c.l.b16 %v1036
        %v1069 = vunpack.c.l.b16 %v1037
        %v1070 = vunpack.c.l.b16 %v1038
        %v1071 = vunpack.c.l.b16 %v1039
        %v1072 = vpack.c.b16 %v1061, %v1060
        %v1073 = vpack.c.b16 %v1063, %v1062
        %v1074 = vpack.c.b16 %v1065, %v1064
        %v1075 = vpack.c.b16 %v1067, %v1066
        %v1076 = vpack.c.b16 %v1069, %v1068
        %v1077 = vpack.c.b16 %v1071, %v1070
        %vm1084 = vcmask 785408
        %v1086 = vsel %vm1084, %v1040, 0
        %1088 = vmatprep.subr.bf16.mxu0 0
        %1089 = vmatpush1.bf16.msra.mxu0 %v1072
        %1090 = vmatprep.subr.bf16.mxu0 0
        %1091 = vmatpush1.bf16.msra.mxu0 %v1073
        %1092 = vmatprep.subr.bf16.mxu0 0
        %1093 = vmatpush1.bf16.msra.mxu0 %v1074
        %1094 = vmatprep.subr.bf16.mxu0 0
        %1095 = vmatpush1.bf16.msra.mxu0 %v1075
        %1096 = vmatprep.subr.bf16.mxu0 0
        %1097 = vmatpush1.bf16.msra.mxu0 %v1076
        %1098 = vmatprep.subr.bf16.mxu0 0
        %1099 = vmatpush1.bf16.msra.mxu0 %v1077
        %1100 = vmatprep.subr.bf16.mxu0 0
        %1101 = vmatpush1.bf16.msra.mxu0 0
        %1102 = vmatprep.subr.bf16.mxu0 0
        %1103 = vmatpush1.bf16.msra.mxu0 0
        %1104 = vmatprep.subr.bf16.mxu0 0
        %1105 = vmatpush1.bf16.msra.mxu0 0
        %1106 = vmatprep.subr.bf16.mxu0 0
        %1107 = vmatpush1.bf16.msra.mxu0 0
        %1108 = vmatprep.subr.bf16.mxu0 0
        %1109 = vmatpush1.bf16.msra.mxu0 0
        %1110 = vmatprep.subr.bf16.mxu0 0
        %1111 = vmatpush1.bf16.msra.mxu0 0
        %1112 = vmatprep.subr.bf16.mxu0 0
        %1113 = vmatpush1.bf16.msra.mxu0 0
        %1114 = vmatprep.subr.bf16.mxu0 0
        %1115 = vmatpush1.bf16.msra.mxu0 0
        %1116 = vmatprep.subr.bf16.mxu0 0
        %1117 = vmatpush1.bf16.msra.mxu0 0
        %1118 = vmatprep.subr.bf16.mxu0 0
        %1119 = vmatpush1.bf16.msra.mxu0 0
        %1120 = vmatprep.mubr.bf16.mxu0 0
        %1121 = vmatmul.mubr.bf16.gmra.mrb[0].mxu0 %v1086
        %v1122 = vpop.f32.mrb[0].mxu0
        %v1123 = vadd.f32 %v1046, %v1122
        %v1124 = vpop.f32.mrb[0].mxu0
        %v1125 = vpop.f32.mrb[0].mxu0
        %v1126 = vpop.f32.mrb[0].mxu0
        %1127 = vdwg.mxu0
        %v1128 = vmax.f32 %v1123, 0.0
        %v1129 = vld [vmem:[%s7] sm:$0xf]
        %v1130 = vld [vmem:[%s7 + $0x4] sm:$0xf]
        %v1131 = vld [vmem:[%s7 + $0x8] sm:$0xf]
        %v1132 = vld [vmem:[%s7 + $0xc] sm:$0xf]
        %v1133 = vld [vmem:[%s7 + $0x10] sm:$0xf]
        %v1134 = vld [vmem:[%s7 + $0x14] sm:$0xf]
        %v1135 = vld [vmem:[%s7 + $0x18] sm:$0xf]
        %v1136 = vld [vmem:[%s7 + $0x1c] sm:$0xf]
        %v1137 = vld [vmem:[%s7 + $0x20] sm:$0xf]
        %v1138 = vld [vmem:[%s7 + $0x24] sm:$0xf]
        %v1139 = vld [vmem:[%s7 + $0x28] sm:$0xf]
        %v1140 = vld [vmem:[%s7 + $0x2c] sm:$0xf]
        %v1141 = vpack.c.bf16 %v1128, %v1128
        %v1142 = vld [vmem:[%s8] sm:$0x1]
        %v1144 = vlaneseq
        %v1145 = vshrl.u32 %v1144, 7
        %v1146 = vsub.s32 0, %v1145
        %v1147 = vrot.slane %v1142, %v1146
        %v1161 = vunpack.c.l.b16 %v1129
        %v1162 = vunpack.c.l.b16 %v1130
        %v1163 = vunpack.c.l.b16 %v1131
        %v1164 = vunpack.c.l.b16 %v1132
        %v1165 = vunpack.c.l.b16 %v1133
        %v1166 = vunpack.c.l.b16 %v1134
        %v1167 = vunpack.c.l.b16 %v1135
        %v1168 = vunpack.c.l.b16 %v1136
        %v1169 = vunpack.c.l.b16 %v1137
        %v1170 = vunpack.c.l.b16 %v1138
        %v1171 = vunpack.c.l.b16 %v1139
        %v1172 = vunpack.c.l.b16 %v1140
        %v1173 = vpack.c.b16 %v1162, %v1161
        %v1174 = vpack.c.b16 %v1164, %v1163
        %v1175 = vpack.c.b16 %v1166, %v1165
        %v1176 = vpack.c.b16 %v1168, %v1167
        %v1177 = vpack.c.b16 %v1170, %v1169
        %v1178 = vpack.c.b16 %v1172, %v1171
        %v1186 = vsel %vm1084, %v1141, 0
        %1188 = vmatprep.subr.bf16.mxu0 0
        %1189 = vmatpush1.bf16.msra.mxu0 %v1173
        %1190 = vmatprep.subr.bf16.mxu0 0
        %1191 = vmatpush1.bf16.msra.mxu0 %v1174
        %1192 = vmatprep.subr.bf16.mxu0 0
        %1193 = vmatpush1.bf16.msra.mxu0 %v1175
        %1194 = vmatprep.subr.bf16.mxu0 0
        %1195 = vmatpush1.bf16.msra.mxu0 %v1176
        %1196 = vmatprep.subr.bf16.mxu0 0
        %1197 = vmatpush1.bf16.msra.mxu0 %v1177
        %1198 = vmatprep.subr.bf16.mxu0 0
        %1199 = vmatpush1.bf16.msra.mxu0 %v1178
        %1200 = vmatprep.subr.bf16.mxu0 0
        %1201 = vmatpush1.bf16.msra.mxu0 0
        %1202 = vmatprep.subr.bf16.mxu0 0
        %1203 = vmatpush1.bf16.msra.mxu0 0
        %1204 = vmatprep.subr.bf16.mxu0 0
        %1205 = vmatpush1.bf16.msra.mxu0 0
        %1206 = vmatprep.subr.bf16.mxu0 0
        %1207 = vmatpush1.bf16.msra.mxu0 0
        %1208 = vmatprep.subr.bf16.mxu0 0
        %1209 = vmatpush1.bf16.msra.mxu0 0
        %1210 = vmatprep.subr.bf16.mxu0 0
        %1211 = vmatpush1.bf16.msra.mxu0 0
        %1212 = vmatprep.subr.bf16.mxu0 0
        %1213 = vmatpush1.bf16.msra.mxu0 0
        %1214 = vmatprep.subr.bf16.mxu0 0
        %1215 = vmatpush1.bf16.msra.mxu0 0
        %1216 = vmatprep.subr.bf16.mxu0 0
        %1217 = vmatpush1.bf16.msra.mxu0 0
        %1218 = vmatprep.subr.bf16.mxu0 0
        %1219 = vmatpush1.bf16.msra.mxu0 0
        %1220 = vmatprep.mubr.bf16.mxu0 0
        %1221 = vmatmul.mubr.bf16.gmra.mrb[0].mxu0 %v1186
        %v1222 = vpop.f32.mrb[0].mxu0
        %v1223 = vadd.f32 %v1147, %v1222
        %v1224 = vpop.f32.mrb[0].mxu0
        %v1225 = vpop.f32.mrb[0].mxu0
        %v1226 = vpop.f32.mrb[0].mxu0
        %1227 = vdwg.mxu0
        %v1228 = vld [vmem:[%s1] sm:$0xff]
        %v1229 = vadd.f32 %v1223, %v1228
        %vm1230 = vcmask 261120
        %1231 = vst.msk [vmem:[#allocation2] sm:$0xff] %vm1230, %v1229
      $region124: #{tpu_custom_call.1} parent=119 // pred_fallthru
        _
      %v1232 = vld [vmem:[#allocation2] sm:$0xff]
      %v1233 = vld [vmem:[%s2] sm:$0xff]
      %v1234 = vld [vmem:[%s934] sm:$0x1]
      %v1235 = vld [vmem:[%s937] sm:$0x1]
      %vm1236 = vcmask 261120
      %v1237 = vsel %vm1236, %v1232, 0.0
      %1238 = vadd.xlane.f32.xlu0 %v1237
      %v1239 = vpop.xlane.xlu0 %1238
      %v1240 = vrcp.pop 32.0
      %v1241 = vmul.f32 %v1239, %v1240
      %v1242 = vsub.f32 %v1232, %v1241
      %v1243 = vmul.f32 %v1242, %v1242
      %v1244 = vsel %vm1236, %v1243, 0.0
      %1245 = vadd.xlane.f32.xlu0 %v1244
      %v1246 = vpop.xlane.xlu0 %1245
      %v1247 = vmul.f32 %v1246, %v1240
      %v1248 = vadd.f32 %v1247, 1e-05
      %v1249 = vrsqrt.pop %v1248
      %v1250 = vmul.f32 %v1242, %v1249
      %v1252 = vlaneseq
      %v1253 = vshrl.u32 %v1252, 7
      %v1254 = vsub.s32 0, %v1253
      %v1255 = vrot.slane %v1234, %v1254
      %v1257 = vmul.f32 %v1250, %v1255
      %v1259 = vlaneseq
      %v1260 = vshrl.u32 %v1259, 7
      %v1261 = vsub.s32 0, %v1260
      %v1262 = vrot.slane %v1235, %v1261
      %v1264 = vadd.f32 %v1257, %v1262
      %v1265 = vld [vmem:[%s920] sm:$0xf]
      %v1266 = vld [vmem:[%s920 + $0x4] sm:$0xf]
      %v1267 = vld [vmem:[%s920 + $0x8] sm:$0xf]
      %v1268 = vld [vmem:[%s920 + $0xc] sm:$0xf]
      %v1269 = vpack.c.bf16 %v1264, %v1264
      %v1270 = vld [vmem:[%s923] sm:$0x1]
      %v1272 = vlaneseq
      %v1273 = vshrl.u32 %v1272, 7
      %v1274 = vsub.s32 0, %v1273
      %v1275 = vrot.slane %v1270, %v1274
      %v1281 = vunpack.c.l.b16 %v1265
      %v1282 = vunpack.c.l.b16 %v1266
      %v1283 = vunpack.c.l.b16 %v1267
      %v1284 = vunpack.c.l.b16 %v1268
      %v1285 = vpack.c.b16 %v1282, %v1281
      %v1286 = vpack.c.b16 %v1284, %v1283
      %v1290 = vsel %vm1236, %v1269, 0
      %1292 = vmatprep.subr.bf16.mxu0 0
      %1293 = vmatpush1.bf16.msra.mxu0 %v1285
      %1294 = vmatprep.subr.bf16.mxu0 0
      %1295 = vmatpush1.bf16.msra.mxu0 %v1286
      %1296 = vmatprep.subr.bf16.mxu0 0
      %1297 = vmatpush1.bf16.msra.mxu0 0
      %1298 = vmatprep.subr.bf16.mxu0 0
      %1299 = vmatpush1.bf16.msra.mxu0 0
      %1300 = vmatprep.subr.bf16.mxu0 0
      %1301 = vmatpush1.bf16.msra.mxu0 0
      %1302 = vmatprep.subr.bf16.mxu0 0
      %1303 = vmatpush1.bf16.msra.mxu0 0
      %1304 = vmatprep.subr.bf16.mxu0 0
      %1305 = vmatpush1.bf16.msra.mxu0 0
      %1306 = vmatprep.subr.bf16.mxu0 0
      %1307 = vmatpush1.bf16.msra.mxu0 0
      %1308 = vmatprep.subr.bf16.mxu0 0
      %1309 = vmatpush1.bf16.msra.mxu0 0
      %1310 = vmatprep.subr.bf16.mxu0 0
      %1311 = vmatpush1.bf16.msra.mxu0 0
      %1312 = vmatprep.subr.bf16.mxu0 0
      %1313 = vmatpush1.bf16.msra.mxu0 0
      %1314 = vmatprep.subr.bf16.mxu0 0
      %1315 = vmatpush1.bf16.msra.mxu0 0
      %1316 = vmatprep.subr.bf16.mxu0 0
      %1317 = vmatpush1.bf16.msra.mxu0 0
      %1318 = vmatprep.subr.bf16.mxu0 0
      %1319 = vmatpush1.bf16.msra.mxu0 0
      %1320 = vmatprep.subr.bf16.mxu0 0
      %1321 = vmatpush1.bf16.msra.mxu0 0
      %1322 = vmatprep.subr.bf16.mxu0 0
      %1323 = vmatpush1.bf16.msra.mxu0 0
      %1324 = vmatprep.mubr.bf16.mxu0 0
      %1325 = vmatmul.mubr.bf16.gmra.mrb[0].mxu0 %v1290
      %v1326 = vpop.f32.mrb[0].mxu0
      %v1327 = vadd.f32 %v1275, %v1326
      %v1328 = vpop.f32.mrb[0].mxu0
      %v1329 = vpop.f32.mrb[0].mxu0
      %v1330 = vpop.f32.mrb[0].mxu0
      %1331 = vdwg.mxu0
      %v1332 = vpack.c.bf16 %v1327, %v1327
      %1334 = vrot.lane.b32.xlu0 %v1332, 96
      %v1335 = vpop.permute.xlu0 %1334
      %vm1336 = vcmask 64512
      %v1338 = vsel %vm1336, %v1332, 0
      %v1341 = vsel %vm1336, %v1335, 0
      %1343 = vmatprep.subr.bf16.mxu0 0
      %1344 = vmatpush1.bf16.xpose.msra.mxu0 %v1341
      %1345 = vmatprep.subr.bf16.mxu0 0
      %1346 = vmatpush1.bf16.xpose.msra.mxu0 0
      %1347 = vmatprep.subr.bf16.mxu0 0
      %1348 = vmatpush1.bf16.xpose.msra.mxu0 0
      %1349 = vmatprep.subr.bf16.mxu0 0
      %1350 = vmatpush1.bf16.xpose.msra.mxu0 0
      %1351 = vmatprep.subr.bf16.mxu0 0
      %1352 = vmatpush1.bf16.xpose.msra.mxu0 0
      %1353 = vmatprep.subr.bf16.mxu0 0
      %1354 = vmatpush1.bf16.xpose.msra.mxu0 0
      %1355 = vmatprep.subr.bf16.mxu0 0
      %1356 = vmatpush1.bf16.xpose.msra.mxu0 0
      %1357 = vmatprep.subr.bf16.mxu0 0
      %1358 = vmatpush1.bf16.xpose.msra.mxu0 0
      %1359 = vmatprep.subr.bf16.mxu0 0
      %1360 = vmatpush1.bf16.xpose.msra.mxu0 0
      %1361 = vmatprep.subr.bf16.mxu0 0
      %1362 = vmatpush1.bf16.xpose.msra.mxu0 0
      %1363 = vmatprep.subr.bf16.mxu0 0
      %1364 = vmatpush1.bf16.xpose.msra.mxu0 0
      %1365 = vmatprep.subr.bf16.mxu0 0
      %1366 = vmatpush1.bf16.xpose.msra.mxu0 0
      %1367 = vmatprep.subr.bf16.mxu0 0
      %1368 = vmatpush1.bf16.xpose.msra.mxu0 0
      %1369 = vmatprep.subr.bf16.mxu0 0
      %1370 = vmatpush1.bf16.xpose.msra.mxu0 0
      %1371 = vmatprep.subr.bf16.mxu0 0
      %1372 = vmatpush1.bf16.xpose.msra.mxu0 0
      %1373 = vmatprep.subr.bf16.mxu0 0
      %1374 = vmatpush1.bf16.xpose.msra.mxu0 0
      %1375 = vmatprep.mubr.bf16.mxu0 0
      %1376 = vmatmul.mubr.bf16.gmra.mrb[0].mxu0 %v1338
      %v1377 = vpop.f32.mrb[0].mxu0
      %v1378 = vadd.f32 0.0, %v1377
      %v1379 = vpop.f32.mrb[0].mxu0
      %v1380 = vpop.f32.mrb[0].mxu0
      %v1381 = vpop.f32.mrb[0].mxu0
      %1382 = vdwg.mxu0
      %v1383 = vmul.f32 %v1378, 0.35355338
      %v1384 = vadd.f32 %v1383, %v1233
      %v1385 = vsel %vm1336, %v1384, -inf
      %1386 = vmax.xlane.f32.xlu0 %v1385
      %v1387 = vpop.xlane.xlu0 %1386
      %v1388 = vsub.f32 %v1384, %v1387
      %v1389 = vmul.f32 %v1388, 1.442695
      %v1390 = vpow.pop %v1389
      %v1391 = vsel %vm1336, %v1390, 0.0
      %1392 = vadd.xlane.f32.xlu0 %v1391
      %v1393 = vpop.xlane.xlu0 %1392
      %v1394 = vrcp.pop %v1393
      %v1395 = vmul.f32 %v1390, %v1394
      %v1396 = vpack.c.bf16 %v1395, %v1395
      %1397 = vrot.lane.b32.xlu0 %v1332, 64
      %v1398 = vpop.permute.xlu0 %1397
      %v1400 = vsel %vm1336, %v1396, 0
      %vm1402 = vcmask 1043456
      %v1404 = vsel %vm1402, %v1398, 0
      %1406 = vmatprep.subr.bf16.mxu0 0
      %1407 = vmatpush1.bf16.msra.mxu0 %v1404
      %1408 = vmatprep.subr.bf16.mxu0 0
      %1409 = vmatpush1.bf16.msra.mxu0 0
      %1410 = vmatprep.subr.bf16.mxu0 0
      %1411 = vmatpush1.bf16.msra.mxu0 0
      %1412 = vmatprep.subr.bf16.mxu0 0
      %1413 = vmatpush1.bf16.msra.mxu0 0
      %1414 = vmatprep.subr.bf16.mxu0 0
      %1415 = vmatpush1.bf16.msra.mxu0 0
      %1416 = vmatprep.subr.bf16.mxu0 0
      %1417 = vmatpush1.bf16.msra.mxu0 0
      %1418 = vmatprep.subr.bf16.mxu0 0
      %1419 = vmatpush1.bf16.msra.mxu0 0
      %1420 = vmatprep.subr.bf16.mxu0 0
      %1421 = vmatpush1.bf16.msra.mxu0 0
      %1422 = vmatprep.subr.bf16.mxu0 0
      %1423 = vmatpush1.bf16.msra.mxu0 0
      %1424 = vmatprep.subr.bf16.mxu0 0
      %1425 = vmatpush1.bf16.msra.mxu0 0
      %1426 = vmatprep.subr.bf16.mxu0 0
      %1427 = vmatpush1.bf16.msra.mxu0 0
      %1428 = vmatprep.subr.bf16.mxu0 0
      %1429 = vmatpush1.bf16.msra.mxu0 0
      %1430 = vmatprep.subr.bf16.mxu0 0
      %1431 = vmatpush1.bf16.msra.mxu0 0
      %1432 = vmatprep.subr.bf16.mxu0 0
      %1433 = vmatpush1.bf16.msra.mxu0 0
      %1434 = vmatprep.subr.bf16.mxu0 0
      %1435 = vmatpush1.bf16.msra.mxu0 0
      %1436 = vmatprep.subr.bf16.mxu0 0
      %1437 = vmatpush1.bf16.msra.mxu0 0
      %1438 = vmatprep.mubr.bf16.mxu0 0
      %1439 = vmatmul.mubr.bf16.gmra.mrb[0].mxu0 %v1400
      %v1440 = vpop.f32.mrb[0].mxu0
      %v1441 = vadd.f32 0.0, %v1440
      %v1442 = vpop.f32.mrb[0].mxu0
      %v1443 = vpop.f32.mrb[0].mxu0
      %v1444 = vpop.f32.mrb[0].mxu0
      %1445 = vdwg.mxu0
      %1446 = vrot.lane.b32.xlu0 %v1332, 120
      %v1447 = vpop.permute.xlu0 %1446
      %1448 = vrot.lane.b32.xlu0 %v1332, 88
      %v1449 = vpop.permute.xlu0 %1448
      %v1451 = vsel %vm1336, %v1447, 0
      %v1454 = vsel %vm1336, %v1449, 0
      %1456 = vmatprep.subr.bf16.mxu0 0
      %1457 = vmatpush1.bf16.xpose.msra.mxu0 %v1454
      %1458 = vmatprep.subr.bf16.mxu0 0
      %1459 = vmatpush1.bf16.xpose.msra.mxu0 0
      %1460 = vmatprep.subr.bf16.mxu0 0
      %1461 = vmatpush1.bf16.xpose.msra.mxu0 0
      %1462 = vmatprep.subr.bf16.mxu0 0
      %1463 = vmatpush1.bf16.xpose.msra.mxu0 0
      %1464 = vmatprep.subr.bf16.mxu0 0
      %1465 = vmatpush1.bf16.xpose.msra.mxu0 0
      %1466 = vmatprep.subr.bf16.mxu0 0
      %1467 = vmatpush1.bf16.xpose.msra.mxu0 0
      %1468 = vmatprep.subr.bf16.mxu0 0
      %1469 = vmatpush1.bf16.xpose.msra.mxu0 0
      %1470 = vmatprep.subr.bf16.mxu0 0
      %1471 = vmatpush1.bf16.xpose.msra.mxu0 0
      %1472 = vmatprep.subr.bf16.mxu0 0
      %1473 = vmatpush1.bf16.xpose.msra.mxu0 0
      %1474 = vmatprep.subr.bf16.mxu0 0
      %1475 = vmatpush1.bf16.xpose.msra.mxu0 0
      %1476 = vmatprep.subr.bf16.mxu0 0
      %1477 = vmatpush1.bf16.xpose.msra.mxu0 0
      %1478 = vmatprep.subr.bf16.mxu0 0
      %1479 = vmatpush1.bf16.xpose.msra.mxu0 0
      %1480 = vmatprep.subr.bf16.mxu0 0
      %1481 = vmatpush1.bf16.xpose.msra.mxu0 0
      %1482 = vmatprep.subr.bf16.mxu0 0
      %1483 = vmatpush1.bf16.xpose.msra.mxu0 0
      %1484 = vmatprep.subr.bf16.mxu0 0
      %1485 = vmatpush1.bf16.xpose.msra.mxu0 0
      %1486 = vmatprep.subr.bf16.mxu0 0
      %1487 = vmatpush1.bf16.xpose.msra.mxu0 0
      %1488 = vmatprep.mubr.bf16.mxu0 0
      %1489 = vmatmul.mubr.bf16.gmra.mrb[0].mxu0 %v1451
      %v1490 = vpop.f32.mrb[0].mxu0
      %v1491 = vadd.f32 0.0, %v1490
      %v1492 = vpop.f32.mrb[0].mxu0
      %v1493 = vpop.f32.mrb[0].mxu0
      %v1494 = vpop.f32.mrb[0].mxu0
      %1495 = vdwg.mxu0
      %v1496 = vmul.f32 %v1491, 0.35355338
      %v1497 = vadd.f32 %v1496, %v1233
      %v1498 = vsel %vm1336, %v1497, -inf
      %1499 = vmax.xlane.f32.xlu0 %v1498
      %v1500 = vpop.xlane.xlu0 %1499
      %v1501 = vsub.f32 %v1497, %v1500
      %v1502 = vmul.f32 %v1501, 1.442695
      %v1503 = vpow.pop %v1502
      %v1504 = vsel %vm1336, %v1503, 0.0
      %1505 = vadd.xlane.f32.xlu0 %v1504
      %v1506 = vpop.xlane.xlu0 %1505
      %v1507 = vrcp.pop %v1506
      %v1508 = vmul.f32 %v1503, %v1507
      %v1509 = vpack.c.bf16 %v1508, %v1508
      %1510 = vrot.lane.b32.xlu0 %v1332, 56
      %v1511 = vpop.permute.xlu0 %1510
      %v1513 = vsel %vm1336, %v1509, 0
      %v1516 = vsel %vm1402, %v1511, 0
      %1518 = vmatprep.subr.bf16.mxu0 0
      %1519 = vmatpush1.bf16.msra.mxu0 %v1516
      %1520 = vmatprep.subr.bf16.mxu0 0
      %1521 = vmatpush1.bf16.msra.mxu0 0
      %1522 = vmatprep.subr.bf16.mxu0 0
      %1523 = vmatpush1.bf16.msra.mxu0 0
      %1524 = vmatprep.subr.bf16.mxu0 0
      %1525 = vmatpush1.bf16.msra.mxu0 0
      %1526 = vmatprep.subr.bf16.mxu0 0
      %1527 = vmatpush1.bf16.msra.mxu0 0
      %1528 = vmatprep.subr.bf16.mxu0 0
      %1529 = vmatpush1.bf16.msra.mxu0 0
      %1530 = vmatprep.subr.bf16.mxu0 0
      %1531 = vmatpush1.bf16.msra.mxu0 0
      %1532 = vmatprep.subr.bf16.mxu0 0
      %1533 = vmatpush1.bf16.msra.mxu0 0
      %1534 = vmatprep.subr.bf16.mxu0 0
      %1535 = vmatpush1.bf16.msra.mxu0 0
      %1536 = vmatprep.subr.bf16.mxu0 0
      %1537 = vmatpush1.bf16.msra.mxu0 0
      %1538 = vmatprep.subr.bf16.mxu0 0
      %1539 = vmatpush1.bf16.msra.mxu0 0
      %1540 = vmatprep.subr.bf16.mxu0 0
      %1541 = vmatpush1.bf16.msra.mxu0 0
      %1542 = vmatprep.subr.bf16.mxu0 0
      %1543 = vmatpush1.bf16.msra.mxu0 0
      %1544 = vmatprep.subr.bf16.mxu0 0
      %1545 = vmatpush1.bf16.msra.mxu0 0
      %1546 = vmatprep.subr.bf16.mxu0 0
      %1547 = vmatpush1.bf16.msra.mxu0 0
      %1548 = vmatprep.subr.bf16.mxu0 0
      %1549 = vmatpush1.bf16.msra.mxu0 0
      %1550 = vmatprep.mubr.bf16.mxu0 0
      %1551 = vmatmul.mubr.bf16.gmra.mrb[0].mxu0 %v1513
      %v1552 = vpop.f32.mrb[0].mxu0
      %v1553 = vadd.f32 0.0, %v1552
      %v1554 = vpop.f32.mrb[0].mxu0
      %v1555 = vpop.f32.mrb[0].mxu0
      %v1556 = vpop.f32.mrb[0].mxu0
      %1557 = vdwg.mxu0
      %1558 = vrot.lane.b32.xlu0 %v1332, 112
      %v1559 = vpop.permute.xlu0 %1558
      %1560 = vrot.lane.b32.xlu0 %v1332, 80
      %v1561 = vpop.permute.xlu0 %1560
      %v1563 = vsel %vm1336, %v1559, 0
      %v1566 = vsel %vm1336, %v1561, 0
      %1568 = vmatprep.subr.bf16.mxu0 0
      %1569 = vmatpush1.bf16.xpose.msra.mxu0 %v1566
      %1570 = vmatprep.subr.bf16.mxu0 0
      %1571 = vmatpush1.bf16.xpose.msra.mxu0 0
      %1572 = vmatprep.subr.bf16.mxu0 0
      %1573 = vmatpush1.bf16.xpose.msra.mxu0 0
      %1574 = vmatprep.subr.bf16.mxu0 0
      %1575 = vmatpush1.bf16.xpose.msra.mxu0 0
      %1576 = vmatprep.subr.bf16.mxu0 0
      %1577 = vmatpush1.bf16.xpose.msra.mxu0 0
      %1578 = vmatprep.subr.bf16.mxu0 0
      %1579 = vmatpush1.bf16.xpose.msra.mxu0 0
      %1580 = vmatprep.subr.bf16.mxu0 0
      %1581 = vmatpush1.bf16.xpose.msra.mxu0 0
      %1582 = vmatprep.subr.bf16.mxu0 0
      %1583 = vmatpush1.bf16.xpose.msra.mxu0 0
      %1584 = vmatprep.subr.bf16.mxu0 0
      %1585 = vmatpush1.bf16.xpose.msra.mxu0 0
      %1586 = vmatprep.subr.bf16.mxu0 0
      %1587 = vmatpush1.bf16.xpose.msra.mxu0 0
      %1588 = vmatprep.subr.bf16.mxu0 0
      %1589 = vmatpush1.bf16.xpose.msra.mxu0 0
      %1590 = vmatprep.subr.bf16.mxu0 0
      %1591 = vmatpush1.bf16.xpose.msra.mxu0 0
      %1592 = vmatprep.subr.bf16.mxu0 0
      %1593 = vmatpush1.bf16.xpose.msra.mxu0 0
      %1594 = vmatprep.subr.bf16.mxu0 0
      %1595 = vmatpush1.bf16.xpose.msra.mxu0 0
      %1596 = vmatprep.subr.bf16.mxu0 0
      %1597 = vmatpush1.bf16.xpose.msra.mxu0 0
      %1598 = vmatprep.subr.bf16.mxu0 0
      %1599 = vmatpush1.bf16.xpose.msra.mxu0 0
      %1600 = vmatprep.mubr.bf16.mxu0 0
      %1601 = vmatmul.mubr.bf16.gmra.mrb[0].mxu0 %v1563
      %v1602 = vpop.f32.mrb[0].mxu0
      %v1603 = vadd.f32 0.0, %v1602
      %v1604 = vpop.f32.mrb[0].mxu0
      %v1605 = vpop.f32.mrb[0].mxu0
      %v1606 = vpop.f32.mrb[0].mxu0
      %1607 = vdwg.mxu0
      %v1608 = vmul.f32 %v1603, 0.35355338
      %v1609 = vadd.f32 %v1608, %v1233
      %v1610 = vsel %vm1336, %v1609, -inf
      %1611 = vmax.xlane.f32.xlu0 %v1610
      %v1612 = vpop.xlane.xlu0 %1611
      %v1613 = vsub.f32 %v1609, %v1612
      %v1614 = vmul.f32 %v1613, 1.442695
      %v1615 = vpow.pop %v1614
      %v1616 = vsel %vm1336, %v1615, 0.0
      %1617 = vadd.xlane.f32.xlu0 %v1616
      %v1618 = vpop.xlane.xlu0 %1617
      %v1619 = vrcp.pop %v1618
      %v1620 = vmul.f32 %v1615, %v1619
      %v1621 = vpack.c.bf16 %v1620, %v1620
      %1622 = vrot.lane.b32.xlu0 %v1332, 48
      %v1623 = vpop.permute.xlu0 %1622
      %v1625 = vsel %vm1336, %v1621, 0
      %v1628 = vsel %vm1402, %v1623, 0
      %1630 = vmatprep.subr.bf16.mxu0 0
      %1631 = vmatpush1.bf16.msra.mxu0 %v1628
      %1632 = vmatprep.subr.bf16.mxu0 0
      %1633 = vmatpush1.bf16.msra.mxu0 0
      %1634 = vmatprep.subr.bf16.mxu0 0
      %1635 = vmatpush1.bf16.msra.mxu0 0
      %1636 = vmatprep.subr.bf16.mxu0 0
      %1637 = vmatpush1.bf16.msra.mxu0 0
      %1638 = vmatprep.subr.bf16.mxu0 0
      %1639 = vmatpush1.bf16.msra.mxu0 0
      %1640 = vmatprep.subr.bf16.mxu0 0
      %1641 = vmatpush1.bf16.msra.mxu0 0
      %1642 = vmatprep.subr.bf16.mxu0 0
      %1643 = vmatpush1.bf16.msra.mxu0 0
      %1644 = vmatprep.subr.bf16.mxu0 0
      %1645 = vmatpush1.bf16.msra.mxu0 0
      %1646 = vmatprep.subr.bf16.mxu0 0
      %1647 = vmatpush1.bf16.msra.mxu0 0
      %1648 = vmatprep.subr.bf16.mxu0 0
      %1649 = vmatpush1.bf16.msra.mxu0 0
      %1650 = vmatprep.subr.bf16.mxu0 0
      %1651 = vmatpush1.bf16.msra.mxu0 0
      %1652 = vmatprep.subr.bf16.mxu0 0
      %1653 = vmatpush1.bf16.msra.mxu0 0
      %1654 = vmatprep.subr.bf16.mxu0 0
      %1655 = vmatpush1.bf16.msra.mxu0 0
      %1656 = vmatprep.subr.bf16.mxu0 0
      %1657 = vmatpush1.bf16.msra.mxu0 0
      %1658 = vmatprep.subr.bf16.mxu0 0
      %1659 = vmatpush1.bf16.msra.mxu0 0
      %1660 = vmatprep.subr.bf16.mxu0 0
      %1661 = vmatpush1.bf16.msra.mxu0 0
      %1662 = vmatprep.mubr.bf16.mxu0 0
      %1663 = vmatmul.mubr.bf16.gmra.mrb[0].mxu0 %v1625
      %v1664 = vpop.f32.mrb[0].mxu0
      %v1665 = vadd.f32 0.0, %v1664
      %v1666 = vpop.f32.mrb[0].mxu0
      %v1667 = vpop.f32.mrb[0].mxu0
      %v1668 = vpop.f32.mrb[0].mxu0
      %1669 = vdwg.mxu0
      %1670 = vrot.lane.b32.xlu0 %v1332, 104
      %v1671 = vpop.permute.xlu0 %1670
      %1672 = vrot.lane.b32.xlu0 %v1332, 72
      %v1673 = vpop.permute.xlu0 %1672
      %v1675 = vsel %vm1336, %v1671, 0
      %v1678 = vsel %vm1336, %v1673, 0
      %1680 = vmatprep.subr.bf16.mxu0 0
      %1681 = vmatpush1.bf16.xpose.msra.mxu0 %v1678
      %1682 = vmatprep.subr.bf16.mxu0 0
      %1683 = vmatpush1.bf16.xpose.msra.mxu0 0
      %1684 = vmatprep.subr.bf16.mxu0 0
      %1685 = vmatpush1.bf16.xpose.msra.mxu0 0
      %1686 = vmatprep.subr.bf16.mxu0 0
      %1687 = vmatpush1.bf16.xpose.msra.mxu0 0
      %1688 = vmatprep.subr.bf16.mxu0 0
      %1689 = vmatpush1.bf16.xpose.msra.mxu0 0
      %1690 = vmatprep.subr.bf16.mxu0 0
      %1691 = vmatpush1.bf16.xpose.msra.mxu0 0
      %1692 = vmatprep.subr.bf16.mxu0 0
      %1693 = vmatpush1.bf16.xpose.msra.mxu0 0
      %1694 = vmatprep.subr.bf16.mxu0 0
      %1695 = vmatpush1.bf16.xpose.msra.mxu0 0
      %1696 = vmatprep.subr.bf16.mxu0 0
      %1697 = vmatpush1.bf16.xpose.msra.mxu0 0
      %1698 = vmatprep.subr.bf16.mxu0 0
      %1699 = vmatpush1.bf16.xpose.msra.mxu0 0
      %1700 = vmatprep.subr.bf16.mxu0 0
      %1701 = vmatpush1.bf16.xpose.msra.mxu0 0
      %1702 = vmatprep.subr.bf16.mxu0 0
      %1703 = vmatpush1.bf16.xpose.msra.mxu0 0
      %1704 = vmatprep.subr.bf16.mxu0 0
      %1705 = vmatpush1.bf16.xpose.msra.mxu0 0
      %1706 = vmatprep.subr.bf16.mxu0 0
      %1707 = vmatpush1.bf16.xpose.msra.mxu0 0
      %1708 = vmatprep.subr.bf16.mxu0 0
      %1709 = vmatpush1.bf16.xpose.msra.mxu0 0
      %1710 = vmatprep.subr.bf16.mxu0 0
      %1711 = vmatpush1.bf16.xpose.msra.mxu0 0
      %1712 = vmatprep.mubr.bf16.mxu0 0
      %1713 = vmatmul.mubr.bf16.gmra.mrb[0].mxu0 %v1675
      %v1714 = vpop.f32.mrb[0].mxu0
      %v1715 = vadd.f32 0.0, %v1714
      %v1716 = vpop.f32.mrb[0].mxu0
      %v1717 = vpop.f32.mrb[0].mxu0
      %v1718 = vpop.f32.mrb[0].mxu0
      %1719 = vdwg.mxu0
      %v1720 = vmul.f32 %v1715, 0.35355338
      %v1721 = vadd.f32 %v1720, %v1233
      %v1722 = vsel %vm1336, %v1721, -inf
      %1723 = vmax.xlane.f32.xlu0 %v1722
      %v1724 = vpop.xlane.xlu0 %1723
      %v1725 = vsub.f32 %v1721, %v1724
      %v1726 = vmul.f32 %v1725, 1.442695
      %v1727 = vpow.pop %v1726
      %v1728 = vsel %vm1336, %v1727, 0.0
      %1729 = vadd.xlane.f32.xlu0 %v1728
      %v1730 = vpop.xlane.xlu0 %1729
      %v1731 = vrcp.pop %v1730
      %v1732 = vmul.f32 %v1727, %v1731
      %v1733 = vpack.c.bf16 %v1732, %v1732
      %1734 = vrot.lane.b32.xlu0 %v1332, 40
      %v1735 = vpop.permute.xlu0 %1734
      %v1737 = vsel %vm1336, %v1733, 0
      %v1740 = vsel %vm1402, %v1735, 0
      %1742 = vmatprep.subr.bf16.mxu0 0
      %1743 = vmatpush1.bf16.msra.mxu0 %v1740
      %1744 = vmatprep.subr.bf16.mxu0 0
      %1745 = vmatpush1.bf16.msra.mxu0 0
      %1746 = vmatprep.subr.bf16.mxu0 0
      %1747 = vmatpush1.bf16.msra.mxu0 0
      %1748 = vmatprep.subr.bf16.mxu0 0
      %1749 = vmatpush1.bf16.msra.mxu0 0
      %1750 = vmatprep.subr.bf16.mxu0 0
      %1751 = vmatpush1.bf16.msra.mxu0 0
      %1752 = vmatprep.subr.bf16.mxu0 0
      %1753 = vmatpush1.bf16.msra.mxu0 0
      %1754 = vmatprep.subr.bf16.mxu0 0
      %1755 = vmatpush1.bf16.msra.mxu0 0
      %1756 = vmatprep.subr.bf16.mxu0 0
      %1757 = vmatpush1.bf16.msra.mxu0 0
      %1758 = vmatprep.subr.bf16.mxu0 0
      %1759 = vmatpush1.bf16.msra.mxu0 0
      %1760 = vmatprep.subr.bf16.mxu0 0
      %1761 = vmatpush1.bf16.msra.mxu0 0
      %1762 = vmatprep.subr.bf16.mxu0 0
      %1763 = vmatpush1.bf16.msra.mxu0 0
      %1764 = vmatprep.subr.bf16.mxu0 0
      %1765 = vmatpush1.bf16.msra.mxu0 0
      %1766 = vmatprep.subr.bf16.mxu0 0
      %1767 = vmatpush1.bf16.msra.mxu0 0
      %1768 = vmatprep.subr.bf16.mxu0 0
      %1769 = vmatpush1.bf16.msra.mxu0 0
      %1770 = vmatprep.subr.bf16.mxu0 0
      %1771 = vmatpush1.bf16.msra.mxu0 0
      %1772 = vmatprep.subr.bf16.mxu0 0
      %1773 = vmatpush1.bf16.msra.mxu0 0
      %1774 = vmatprep.mubr.bf16.mxu0 0
      %1775 = vmatmul.mubr.bf16.gmra.mrb[0].mxu0 %v1737
      %v1776 = vpop.f32.mrb[0].mxu0
      %v1777 = vadd.f32 0.0, %v1776
      %v1778 = vpop.f32.mrb[0].mxu0
      %v1779 = vpop.f32.mrb[0].mxu0
      %v1780 = vpop.f32.mrb[0].mxu0
      %1781 = vdwg.mxu0
      %1783 = vrot.lane.b32.xlu0 %v1553, 8
      %v1784 = vpop.permute.xlu0 %1783
      %1787 = vrot.lane.b32.xlu0 %v1665, 16
      %v1788 = vpop.permute.xlu0 %1787
      %1791 = vrot.lane.b32.xlu0 %v1777, 24
      %v1792 = vpop.permute.xlu0 %1791
      %v1794 = vsel %vm1336, %v1441, %v1784
      %vm1795 = vcmask 130048
      %v1796 = vsel %vm1795, %v1794, %v1788
      %vm1797 = vcmask 195584
      %v1798 = vsel %vm1797, %v1796, %v1792
      %v1799 = vld [vmem:[%s928] sm:$0xf]
      %v1800 = vld [vmem:[%s928 + $0x4] sm:$0xf]
      %v1801 = vld [vmem:[%s928 + $0x8] sm:$0xf]
      %v1802 = vld [vmem:[%s928 + $0xc] sm:$0xf]
      %v1803 = vpack.c.bf16 %v1798, %v1798
      %v1804 = vld [vmem:[%s931] sm:$0x1]
      %v1806 = vlaneseq
      %v1807 = vshrl.u32 %v1806, 7
      %v1808 = vsub.s32 0, %v1807
      %v1809 = vrot.slane %v1804, %v1808
      %v1815 = vunpack.c.l.b16 %v1799
      %v1816 = vunpack.c.l.b16 %v1800
      %v1817 = vunpack.c.l.b16 %v1801
      %v1818 = vunpack.c.l.b16 %v1802
      %v1819 = vpack.c.b16 %v1816, %v1815
      %v1820 = vpack.c.b16 %v1818, %v1817
      %v1824 = vsel %vm1236, %v1803, 0
      %1826 = vmatprep.subr.bf16.mxu0 0
      %1827 = vmatpush1.bf16.msra.mxu0 %v1819
      %1828 = vmatprep.subr.bf16.mxu0 0
      %1829 = vmatpush1.bf16.msra.mxu0 %v1820
      %1830 = vmatprep.subr.bf16.mxu0 0
      %1831 = vmatpush1.bf16.msra.mxu0 0
      %1832 = vmatprep.subr.bf16.mxu0 0
      %1833 = vmatpush1.bf16.msra.mxu0 0
      %1834 = vmatprep.subr.bf16.mxu0 0
      %1835 = vmatpush1.bf16.msra.mxu0 0
      %1836 = vmatprep.subr.bf16.mxu0 0
      %1837 = vmatpush1.bf16.msra.mxu0 0
      %1838 = vmatprep.subr.bf16.mxu0 0
      %1839 = vmatpush1.bf16.msra.mxu0 0
      %1840 = vmatprep.subr.bf16.mxu0 0
      %1841 = vmatpush1.bf16.msra.mxu0 0
      %1842 = vmatprep.subr.bf16.mxu0 0
      %1843 = vmatpush1.bf16.msra.mxu0 0
      %1844 = vmatprep.subr.bf16.mxu0 0
      %1845 = vmatpush1.bf16.msra.mxu0 0
      %1846 = vmatprep.subr.bf16.mxu0 0
      %1847 = vmatpush1.bf16.msra.mxu0 0
      %1848 = vmatprep.subr.bf16.mxu0 0
      %1849 = vmatpush1.bf16.msra.mxu0 0
      %1850 = vmatprep.subr.bf16.mxu0 0
      %1851 = vmatpush1.bf16.msra.mxu0 0
      %1852 = vmatprep.subr.bf16.mxu0 0
      %1853 = vmatpush1.bf16.msra.mxu0 0
      %1854 = vmatprep.subr.bf16.mxu0 0
      %1855 = vmatpush1.bf16.msra.mxu0 0
      %1856 = vmatprep.subr.bf16.mxu0 0
      %1857 = vmatpush1.bf16.msra.mxu0 0
      %1858 = vmatprep.mubr.bf16.mxu0 0
      %1859 = vmatmul.mubr.bf16.gmra.mrb[0].mxu0 %v1824
      %v1860 = vpop.f32.mrb[0].mxu0
      %v1861 = vadd.f32 %v1809, %v1860
      %v1862 = vpop.f32.mrb[0].mxu0
      %v1863 = vpop.f32.mrb[0].mxu0
      %v1864 = vpop.f32.mrb[0].mxu0
      %1865 = vdwg.mxu0
      %v1866 = vadd.f32 %v1232, %v1861
      %v1867 = vld [vmem:[%s956] sm:$0x1]
      %v1868 = vld [vmem:[%s959] sm:$0x1]
      %v1869 = vsel %vm1236, %v1866, 0.0
      %1870 = vadd.xlane.f32.xlu0 %v1869
      %v1871 = vpop.xlane.xlu0 %1870
      %v1872 = vmul.f32 %v1871, %v1240
      %v1873 = vsub.f32 %v1866, %v1872
      %v1874 = vmul.f32 %v1873, %v1873
      %v1875 = vsel %vm1236, %v1874, 0.0
      %1876 = vadd.xlane.f32.xlu0 %v1875
      %v1877 = vpop.xlane.xlu0 %1876
      %v1878 = vmul.f32 %v1877, %v1240
      %v1879 = vadd.f32 %v1878, 1e-05
      %v1880 = vrsqrt.pop %v1879
      %v1881 = vmul.f32 %v1873, %v1880
      %v1883 = vlaneseq
      %v1884 = vshrl.u32 %v1883, 7
      %v1885 = vsub.s32 0, %v1884
      %v1886 = vrot.slane %v1867, %v1885
      %v1888 = vmul.f32 %v1881, %v1886
      %v1890 = vlaneseq
      %v1891 = vshrl.u32 %v1890, 7
      %v1892 = vsub.s32 0, %v1891
      %v1893 = vrot.slane %v1868, %v1892
      %v1895 = vadd.f32 %v1888, %v1893
      %v1896 = vld [vmem:[%s942] sm:$0xf]
      %v1897 = vld [vmem:[%s942 + $0x4] sm:$0xf]
      %v1898 = vld [vmem:[%s942 + $0x8] sm:$0xf]
      %v1899 = vld [vmem:[%s942 + $0xc] sm:$0xf]
      %v1900 = vpack.c.bf16 %v1895, %v1895
      %v1901 = vld [vmem:[%s945] sm:$0x1]
      %v1903 = vlaneseq
      %v1904 = vshrl.u32 %v1903, 7
      %v1905 = vsub.s32 0, %v1904
      %v1906 = vrot.slane %v1901, %v1905
      %v1912 = vunpack.c.l.b16 %v1896
      %v1913 = vunpack.c.l.b16 %v1897
      %v1914 = vunpack.c.l.b16 %v1898
      %v1915 = vunpack.c.l.b16 %v1899
      %v1916 = vpack.c.b16 %v1913, %v1912
      %v1917 = vpack.c.b16 %v1915, %v1914
      %v1921 = vsel %vm1236, %v1900, 0
      %1923 = vmatprep.subr.bf16.mxu0 0
      %1924 = vmatpush1.bf16.msra.mxu0 %v1916
      %1925 = vmatprep.subr.bf16.mxu0 0
      %1926 = vmatpush1.bf16.msra.mxu0 %v1917
      %1927 = vmatprep.subr.bf16.mxu0 0
      %1928 = vmatpush1.bf16.msra.mxu0 0
      %1929 = vmatprep.subr.bf16.mxu0 0
      %1930 = vmatpush1.bf16.msra.mxu0 0
      %1931 = vmatprep.subr.bf16.mxu0 0
      %1932 = vmatpush1.bf16.msra.mxu0 0
      %1933 = vmatprep.subr.bf16.mxu0 0
      %1934 = vmatpush1.bf16.msra.mxu0 0
      %1935 = vmatprep.subr.bf16.mxu0 0
      %1936 = vmatpush1.bf16.msra.mxu0 0
      %1937 = vmatprep.subr.bf16.mxu0 0
      %1938 = vmatpush1.bf16.msra.mxu0 0
      %1939 = vmatprep.subr.bf16.mxu0 0
      %1940 = vmatpush1.bf16.msra.mxu0 0
      %1941 = vmatprep.subr.bf16.mxu0 0
      %1942 = vmatpush1.bf16.msra.mxu0 0
      %1943 = vmatprep.subr.bf16.mxu0 0
      %1944 = vmatpush1.bf16.msra.mxu0 0
      %1945 = vmatprep.subr.bf16.mxu0 0
      %1946 = vmatpush1.bf16.msra.mxu0 0
      %1947 = vmatprep.subr.bf16.mxu0 0
      %1948 = vmatpush1.bf16.msra.mxu0 0
      %1949 = vmatprep.subr.bf16.mxu0 0
      %1950 = vmatpush1.bf16.msra.mxu0 0
      %1951 = vmatprep.subr.bf16.mxu0 0
      %1952 = vmatpush1.bf16.msra.mxu0 0
      %1953 = vmatprep.subr.bf16.mxu0 0
      %1954 = vmatpush1.bf16.msra.mxu0 0
      %1955 = vmatprep.mubr.bf16.mxu0 0
      %1956 = vmatmul.mubr.bf16.gmra.mrb[0].mxu0 %v1921
      %v1957 = vpop.f32.mrb[0].mxu0
      %v1958 = vadd.f32 %v1906, %v1957
      %v1959 = vpop.f32.mrb[0].mxu0
      %v1960 = vpop.f32.mrb[0].mxu0
      %v1961 = vpop.f32.mrb[0].mxu0
      %1962 = vdwg.mxu0
      %v1963 = vmax.f32 %v1958, 0.0
      %v1964 = vld [vmem:[%s950] sm:$0xf]
      %v1965 = vld [vmem:[%s950 + $0x4] sm:$0xf]
      %v1966 = vld [vmem:[%s950 + $0x8] sm:$0xf]
      %v1967 = vld [vmem:[%s950 + $0xc] sm:$0xf]
      %v1968 = vld [vmem:[%s950 + $0x10] sm:$0xf]
      %v1969 = vld [vmem:[%s950 + $0x14] sm:$0xf]
      %v1970 = vld [vmem:[%s950 + $0x18] sm:$0xf]
      %v1971 = vld [vmem:[%s950 + $0x1c] sm:$0xf]
      %v1972 = vld [vmem:[%s950 + $0x20] sm:$0xf]
      %v1973 = vld [vmem:[%s950 + $0x24] sm:$0xf]
      %v1974 = vld [vmem:[%s950 + $0x28] sm:$0xf]
      %v1975 = vld [vmem:[%s950 + $0x2c] sm:$0xf]
      %v1976 = vld [vmem:[%s950 + $0x30] sm:$0xf]
      %v1977 = vld [vmem:[%s950 + $0x34] sm:$0xf]
      %v1978 = vld [vmem:[%s950 + $0x38] sm:$0xf]
      %v1979 = vld [vmem:[%s950 + $0x3c] sm:$0xf]
      %v1980 = vpack.c.bf16 %v1963, %v1963
      %v1981 = vld [vmem:[%s953] sm:$0x1]
      %v1983 = vlaneseq
      %v1984 = vshrl.u32 %v1983, 7
      %v1985 = vsub.s32 0, %v1984
      %v1986 = vrot.slane %v1981, %v1985
      %v2004 = vunpack.c.l.b16 %v1964
      %v2005 = vunpack.c.l.b16 %v1965
      %v2006 = vunpack.c.l.b16 %v1966
      %v2007 = vunpack.c.l.b16 %v1967
      %v2008 = vunpack.c.l.b16 %v1968
      %v2009 = vunpack.c.l.b16 %v1969
      %v2010 = vunpack.c.l.b16 %v1970
      %v2011 = vunpack.c.l.b16 %v1971
      %v2012 = vunpack.c.l.b16 %v1972
      %v2013 = vunpack.c.l.b16 %v1973
      %v2014 = vunpack.c.l.b16 %v1974
      %v2015 = vunpack.c.l.b16 %v1975
      %v2016 = vunpack.c.l.b16 %v1976
      %v2017 = vunpack.c.l.b16 %v1977
      %v2018 = vunpack.c.l.b16 %v1978
      %v2019 = vunpack.c.l.b16 %v1979
      %v2020 = vpack.c.b16 %v2005, %v2004
      %v2021 = vpack.c.b16 %v2007, %v2006
      %v2022 = vpack.c.b16 %v2009, %v2008
      %v2023 = vpack.c.b16 %v2011, %v2010
      %v2024 = vpack.c.b16 %v2013, %v2012
      %v2025 = vpack.c.b16 %v2015, %v2014
      %v2026 = vpack.c.b16 %v2017, %v2016
      %v2027 = vpack.c.b16 %v2019, %v2018
      %2036 = vmatprep.subr.bf16.mxu0 0
      %2037 = vmatpush1.bf16.msra.mxu0 %v2020
      %2038 = vmatprep.subr.bf16.mxu0 0
      %2039 = vmatpush1.bf16.msra.mxu0 %v2021
      %2040 = vmatprep.subr.bf16.mxu0 0
      %2041 = vmatpush1.bf16.msra.mxu0 %v2022
      %2042 = vmatprep.subr.bf16.mxu0 0
      %2043 = vmatpush1.bf16.msra.mxu0 %v2023
      %2044 = vmatprep.subr.bf16.mxu0 0
      %2045 = vmatpush1.bf16.msra.mxu0 %v2024
      %2046 = vmatprep.subr.bf16.mxu0 0
      %2047 = vmatpush1.bf16.msra.mxu0 %v2025
      %2048 = vmatprep.subr.bf16.mxu0 0
      %2049 = vmatpush1.bf16.msra.mxu0 %v2026
      %2050 = vmatprep.subr.bf16.mxu0 0
      %2051 = vmatpush1.bf16.msra.mxu0 %v2027
      %2052 = vmatprep.subr.bf16.mxu0 0
      %2053 = vmatpush1.bf16.msra.mxu0 0
      %2054 = vmatprep.subr.bf16.mxu0 0
      %2055 = vmatpush1.bf16.msra.mxu0 0
      %2056 = vmatprep.subr.bf16.mxu0 0
      %2057 = vmatpush1.bf16.msra.mxu0 0
      %2058 = vmatprep.subr.bf16.mxu0 0
      %2059 = vmatpush1.bf16.msra.mxu0 0
      %2060 = vmatprep.subr.bf16.mxu0 0
      %2061 = vmatpush1.bf16.msra.mxu0 0
      %2062 = vmatprep.subr.bf16.mxu0 0
      %2063 = vmatpush1.bf16.msra.mxu0 0
      %2064 = vmatprep.subr.bf16.mxu0 0
      %2065 = vmatpush1.bf16.msra.mxu0 0
      %2066 = vmatprep.subr.bf16.mxu0 0
      %2067 = vmatpush1.bf16.msra.mxu0 0
      %2068 = vmatprep.mubr.bf16.mxu0 0
      %2069 = vmatmul.mubr.bf16.gmra.mrb[0].mxu0 %v1980
      %v2070 = vpop.f32.mrb[0].mxu0
      %v2071 = vadd.f32 %v1986, %v2070
      %v2072 = vpop.f32.mrb[0].mxu0
      %v2073 = vpop.f32.mrb[0].mxu0
      %v2074 = vpop.f32.mrb[0].mxu0
      %2075 = vdwg.mxu0
      %v2076 = vadd.f32 %v1866, %v2071
      %2077 = vst.msk [vmem:[#allocation2] sm:$0xff] %vm1236, %v2076
      %p2078 = scmp.eq.s32.totalorder %s41, 1
      // Predicated region
      $region125: #{tpu_custom_call.1} parent=119 // pred_check
        %p2079 = pneg %p2078
      $region126: #{tpu_custom_call.1} parent=119 // pred_check_branch
        %2081 = sbr.rel (%p2079) target = $region128
      $region127: #{tpu_custom_call.1} parent=119 // pred_region
        %v2082 = vld [vmem:[%s21] sm:$0x1]
        %v2083 = vld [vmem:[%s22] sm:$0x1]
        %v2084 = vsel %vm1236, %v2076, 0.0
        %2085 = vadd.xlane.f32.xlu0 %v2084
        %v2086 = vpop.xlane.xlu0 %2085
        %v2087 = vmul.f32 %v2086, %v1240
        %v2088 = vsub.f32 %v2076, %v2087
        %v2089 = vmul.f32 %v2088, %v2088
        %v2090 = vsel %vm1236, %v2089, 0.0
        %2091 = vadd.xlane.f32.xlu0 %v2090
        %v2092 = vpop.xlane.xlu0 %2091
        %v2093 = vmul.f32 %v2092, %v1240
        %v2094 = vadd.f32 %v2093, 1e-05
        %v2095 = vrsqrt.pop %v2094
        %v2096 = vmul.f32 %v2088, %v2095
        %v2098 = vlaneseq
        %v2099 = vshrl.u32 %v2098, 7
        %v2100 = vsub.s32 0, %v2099
        %v2101 = vrot.slane %v2082, %v2100
        %v2103 = vmul.f32 %v2096, %v2101
        %v2105 = vlaneseq
        %v2106 = vshrl.u32 %v2105, 7
        %v2107 = vsub.s32 0, %v2106
        %v2108 = vrot.slane %v2083, %v2107
        %v2110 = vadd.f32 %v2103, %v2108
        %v2111 = vld [vmem:[%s23] sm:$0xf]
        %v2112 = vld [vmem:[%s23 + $0x4] sm:$0xf]
        %v2113 = vld [vmem:[%s23 + $0x8] sm:$0xf]
        %v2114 = vld [vmem:[%s23 + $0xc] sm:$0xf]
        %v2115 = vpack.c.bf16 %v2110, %v2110
        %v2116 = vld [vmem:[%s24] sm:$0x1]
        %v2118 = vlaneseq
        %v2119 = vshrl.u32 %v2118, 7
        %v2120 = vsub.s32 0, %v2119
        %v2121 = vrot.slane %v2116, %v2120
        %v2127 = vunpack.c.l.b16 %v2111
        %v2128 = vunpack.c.l.b16 %v2112
        %v2129 = vunpack.c.l.b16 %v2113
        %v2130 = vunpack.c.l.b16 %v2114
        %v2131 = vpack.c.b16 %v2128, %v2127
        %v2132 = vpack.c.b16 %v2130, %v2129
        %v2136 = vsel %vm1236, %v2115, 0
        %2138 = vmatprep.subr.bf16.mxu0 0
        %2139 = vmatpush1.bf16.msra.mxu0 %v2131
        %2140 = vmatprep.subr.bf16.mxu0 0
        %2141 = vmatpush1.bf16.msra.mxu0 %v2132
        %2142 = vmatprep.subr.bf16.mxu0 0
        %2143 = vmatpush1.bf16.msra.mxu0 0
        %2144 = vmatprep.subr.bf16.mxu0 0
        %2145 = vmatpush1.bf16.msra.mxu0 0
        %2146 = vmatprep.subr.bf16.mxu0 0
        %2147 = vmatpush1.bf16.msra.mxu0 0
        %2148 = vmatprep.subr.bf16.mxu0 0
        %2149 = vmatpush1.bf16.msra.mxu0 0
        %2150 = vmatprep.subr.bf16.mxu0 0
        %2151 = vmatpush1.bf16.msra.mxu0 0
        %2152 = vmatprep.subr.bf16.mxu0 0
        %2153 = vmatpush1.bf16.msra.mxu0 0
        %2154 = vmatprep.subr.bf16.mxu0 0
        %2155 = vmatpush1.bf16.msra.mxu0 0
        %2156 = vmatprep.subr.bf16.mxu0 0
        %2157 = vmatpush1.bf16.msra.mxu0 0
        %2158 = vmatprep.subr.bf16.mxu0 0
        %2159 = vmatpush1.bf16.msra.mxu0 0
        %2160 = vmatprep.subr.bf16.mxu0 0
        %2161 = vmatpush1.bf16.msra.mxu0 0
        %2162 = vmatprep.subr.bf16.mxu0 0
        %2163 = vmatpush1.bf16.msra.mxu0 0
        %2164 = vmatprep.subr.bf16.mxu0 0
        %2165 = vmatpush1.bf16.msra.mxu0 0
        %2166 = vmatprep.subr.bf16.mxu0 0
        %2167 = vmatpush1.bf16.msra.mxu0 0
        %2168 = vmatprep.subr.bf16.mxu0 0
        %2169 = vmatpush1.bf16.msra.mxu0 0
        %2170 = vmatprep.mubr.bf16.mxu0 0
        %2171 = vmatmul.mubr.bf16.gmra.mrb[0].mxu0 %v2136
        %v2172 = vpop.f32.mrb[0].mxu0
        %v2173 = vadd.f32 %v2121, %v2172
        %v2174 = vpop.f32.mrb[0].mxu0
        %v2175 = vpop.f32.mrb[0].mxu0
        %v2176 = vpop.f32.mrb[0].mxu0
        %2177 = vdwg.mxu0
        %v2178 = vsel %vm1336, %v2173, -inf
        %2179 = vmax.xlane.f32.xlu0 %v2178
        %v2180 = vpop.xlane.xlu0 %2179
        %v2181 = vsub.f32 %v2173, %v2180
        %v2182 = vmul.f32 %v2181, 1.442695
        %v2183 = vpow.pop %v2182
        %v2184 = vsel %vm1336, %v2183, 0.0
        %2185 = vadd.xlane.f32.xlu0 %v2184
        %v2186 = vpop.xlane.xlu0 %2185
        %v2187 = vrcp.pop %v2186
        %v2188 = vmul.f32 %v2183, %v2187
        %2189 = vst.msk [vmem:[%s963] sm:$0xff] %vm1336, %v2188
      $region128: #{tpu_custom_call.1} parent=119 // pred_fallthru
        _
      %p2190 = scmp.lt.s32.totalorder %s40, 1
      %s2191 = scalar_select %p2190, %s40, 1
      %s2192 = smul.addr %s2191, 8
      %s2193 = scalar_lea.vmem %s25, %s2192
      // Predicated region
      $region129: #{tpu_custom_call.1} parent=119 // pred_check
        %p2194 = pneg %p656
      $region130: #{tpu_custom_call.1} parent=119 // pred_check_branch
        %2196 = sbr.rel (%p2194) target = $region132
      $region131: #{tpu_custom_call.1} parent=119 // pred_region
        _
      $region132: #{tpu_custom_call.1} parent=119 // pred_fallthru
        _
    $region120: #{tpu_custom_call.1} parent=5 // pred_fallthru
      _
    %p2197 = scmp.le.s32.totalorder 2, %s31
    // Predicated region
    $region133: #{tpu_custom_call.1} parent=5 // pred_check
      %p2198 = pneg %p2197
    $region134: #{tpu_custom_call.1} parent=5 // pred_check_branch
      %2200 = sbr.rel (%p2198) target = $region136
    $region135: #{tpu_custom_call.1} parent=5 // pred_region
      %s2201 = ssub.s32 %s31, 2
      // Predicated region
      $region137: #{tpu_custom_call.1} parent=135 // pred_check
        %p2202 = pneg %p662
      $region138: #{tpu_custom_call.1} parent=135 // pred_check_branch
        %2204 = sbr.rel (%p2202) target = $region140
      $region139: #{tpu_custom_call.1} parent=135 // pred_region
        %p2205 = scmp.lt.s32.totalorder %s42, 1
        %s2206 = scalar_select %p2205, %s42, 1
        %s2207 = smul.addr %s2206, 8
        %s2208 = scalar_lea.vmem %s25, %s2207
      $region140: #{tpu_custom_call.1} parent=135 // pred_fallthru
        _
    $region136: #{tpu_custom_call.1} parent=5 // pred_fallthru
      _
  $region6: #{tpu_custom_call.1} parent=0 // loop_footer
    %s35 = sadd.s32 1, %s31
  $region7: #{tpu_custom_call.1} parent=0 // loop_footer_branch
    %30 = sbr.rel target = $region3
  $region8: #{tpu_custom_call.1} parent=0 // loop_exit
    _

</llo_original>
